<compile_context>
chip_gen: v5e
topology: v5e:2x2
jax: 0.10.0
libtpu: 0.0.40
codegen_flags: <defaults>
</compile_context>

<pallas_src>
import math

import numpy as np
import jax
import jax.numpy as jnp
from jax.experimental import pallas as pl
from jax.experimental.pallas import tpu as pltpu

PI = math.pi
HALF_PI = math.pi / 2.0
DIM = 6               # SE(3) tangent-space dimension (3 translation + 3 rotation)
N_ID = DIM // 2       # conditioning half
N_TR = DIM - N_ID     # transformed half


def _round_up(x, m):
    return ((x + m - 1) // m) * m


def _atan_poly(z):
    """Range-reduced minimax arctan (|err| ~ 3e-6 rad), VPU-only ops.

    Mosaic has no guaranteed lowering for lax.atan, so we build it from
    mul/add/select which always lower.
    """
    az = jnp.abs(z)
    inv = az > 1.0
    # Where inv is True, az > 1 so max(az, 1) == az; elsewhere the branch is
    # discarded by the where (and never produces inf/nan).
    x = jnp.where(inv, 1.0 / jnp.maximum(az, 1.0), az)     # x in [0, 1]
    x2 = x * x
    p = jnp.float32(-0.0117212)
    p = p * x2 + 0.05265332
    p = p * x2 - 0.11643287
    p = p * x2 + 0.19354346
    p = p * x2 - 0.33262347
    p = p * x2 + 0.99997726
    r = p * x
    r = jnp.where(inv, HALF_PI - r, r)                     # atan(z) = pi/2 - atan(1/z)
    return jnp.where(z < 0.0, -r, r)


# ---------------------------------------------------------------------------
# Fused kernel: preprocess + (depth+1) coupling layers + permutations
# Feature-major layout: every array is (rows, TILE_B) with batch in the lanes.
# ---------------------------------------------------------------------------
def _make_fused_kernel(num_bins, id_lists, tr_lists, perm_lists):
    n_layers = len(id_lists)

    def kernel(x_ref, w1t_ref, b1_ref, w2t_ref, b2_ref, out_ref):
        # bin index within a segment, as a (num_bins, 1) column (built once)
        k_col = jax.lax.broadcasted_iota(
            jnp.int32, (num_bins, 1), 0).astype(jnp.float32)

        # ---- preprocess: clamp translations, Sphere2Cube on rotations ----
        x = x_ref[...]                                     # (6, TB) lane-dense
        x_p = jnp.clip(x[0:N_ID, :], -1.0, 1.0)            # (3, TB)
        xs = x[N_ID:DIM, :] * (1.0 / PI)                   # (3, TB)
        # manual 3-term sublane sum (pure VPU)
        norm_sq = (xs[0:1, :] * xs[0:1, :]
                   + xs[1:2, :] * xs[1:2, :]
                   + xs[2:3, :] * xs[2:3, :])              # (1, TB)
        in_ball = norm_sq < 1.0
        den = jax.lax.rsqrt(jnp.where(in_ball, 1.0 - norm_sq, 1.0))
        y_rot = _atan_poly(xs * den) * (1.0 / HALF_PI)     # (3, TB)
        y_rot = jnp.where(in_ball, y_rot, 0.0)             # outside ball -> 0 (no NaNs)

        # logical feature rows (pure value bookkeeping, no stores)
        cols = ([x_p[j:j + 1, :] for j in range(N_ID)]
                + [y_rot[j:j + 1, :] for j in range(N_TR)])

        # ---- coupling layers (unrolled at trace time) ----
        for i in range(n_layers):
            w1t = w1t_ref[i]          # (H, N_ID)   pre-transposed
            b1 = b1_ref[i]            # (H, 1)
            w2t = w2t_ref[i]          # (nbt, H)    pre-transposed
            b2 = b2_ref[i]            # (nbt, 1)
            id_idx = id_lists[i]
            tr_idx = tr_lists[i]

            # conditioner MLP, feature-major: h = relu(W1^T x_id + b1) -> (H, TB)
            # K = N_ID = 3 contraction as 3 broadcast-FMAs on the VPU.
            h = b1 + w1t[:, 0:1] * cols[id_idx[0]]
            for k in range(1, N_ID):
                h = h + w1t[:, k:k + 1] * cols[id_idx[k]]
            h = jnp.maximum(h, 0.0)
            # spline logits: (nbt, H) @ (H, TB) on the MXU (bf16 inputs would
            # also be fine here with f32 accumulation).
            sp = jnp.dot(w2t, h, preferred_element_type=jnp.float32) + b2

            # per-feature segmented softmax-CDF on num_bins-sublane strips
            # TODO(synk): strips are 8-aligned only when num_bins % 8 == 0
            # (true for the configs used here); other bin counts still work
            # but pay a relayout.
            new_rows = []
            for k, c in enumerate(tr_idx):
                xr = cols[c]                                        # (1, TB)
                seg = sp[k * num_bins:(k + 1) * num_bins, :]        # (nb, TB)
                m = jnp.max(seg, axis=0, keepdims=True)             # strip max
                e = jnp.exp(seg - m)                                # unnorm. pdf
                inside = (xr >= -1.0) & (xr <= 1.0)
                bin_pos = jnp.clip((xr + 1.0) * 0.5, 0.0, 1.0) * num_bins
                # fused CDF weights: 1 below the bin, frac inside, 0 above
                # (identical to cdf_below + alpha * pdf[bin])
                wgt = jnp.clip(bin_pos - k_col, 0.0, 1.0)           # (nb, TB)
                numer = jnp.sum(e * wgt, axis=0, keepdims=True)     # (1, TB)
                denom = jnp.sum(e, axis=0, keepdims=True)           # >= 1
                out_u = numer * pl.reciprocal(denom, approx=True)
                new_rows.append(jnp.where(inside, out_u * 2.0 - 1.0, xr))

            for k, c in enumerate(tr_idx):
                cols[c] = new_rows[k]
            if perm_lists[i] is not None:                   # RandomPermutations
                cols = [cols[p] for p in perm_lists[i]]

        out_ref[...] = jnp.concatenate(cols, axis=0)        # one lane-dense store

    return kernel


# ---------------------------------------------------------------------------
# Pure-JAX reference (for a self-check)
# ---------------------------------------------------------------------------
def _reference_forward(x, params, num_bins, id_lists, tr_lists, perm_lists):
    hp = jax.lax.Precision.HIGHEST
    x_p = jnp.clip(x[:, :N_ID], -1.0, 1.0)
    xs = x[:, N_ID:] / PI
    nsq = jnp.sum(xs * xs, axis=1, keepdims=True)
    mask = nsq < 1.0
    den = 1.0 / jnp.sqrt(jnp.where(mask, 1.0 - nsq, 1.0))
    yr = jnp.arctan(xs * den) / HALF_PI
    yr = jnp.where(mask, yr, 0.0)
    yr = jnp.where(jnp.isnan(yr), 0.0, yr)
    y = jnp.concatenate([x_p, yr], axis=1)
    for i in range(len(id_lists)):
        w1 = params["w1t"][i].T          # (N_ID, H)
        b1 = params["b1"][i][:, 0]       # (H,)
        w2 = params["w2t"][i].T          # (H, nbt)
        b2 = params["b2"][i][:, 0]       # (nbt,)
        x_id = y[:, jnp.array(id_lists[i])]
        x_tr = y[:, jnp.array(tr_lists[i])]
        h = jnp.maximum(jnp.dot(x_id, w1, precision=hp) + b1, 0.0)
        sp = (jnp.dot(h, w2, precision=hp) + b2).reshape(x.shape[0], N_TR, num_bins)
        pdf = jax.nn.softmax(sp, axis=-1)
        inside = (x_tr >= -1.0) & (x_tr <= 1.0)
        u = jnp.clip((x_tr + 1.0) * 0.5, 0.0, 1.0)
        bin_pos = u * num_bins
        bin_idx = jnp.clip(bin_pos.astype(jnp.int32), 0, num_bins - 1)
        alpha = bin_pos - bin_idx.astype(jnp.float32)
        kk = jnp.arange(num_bins)[None, None, :]
        cdf_b = jnp.sum(jnp.where(kk < bin_idx[..., None], pdf, 0.0), axis=-1)
        sel = jnp.sum(jnp.where(kk == bin_idx[..., None], pdf, 0.0), axis=-1)
        y_tr = jnp.where(inside, (cdf_b + alpha * sel) * 2.0 - 1.0, x_tr)
        y = y.at[:, jnp.array(tr_lists[i])].set(y_tr)
        if perm_lists[i] is not None:
            y = y[:, jnp.array(perm_lists[i])]
    return y


# ---------------------------------------------------------------------------
# Model construction (deterministic, synthetic parameters)
# ---------------------------------------------------------------------------
def build_se3_neural_flows(depth, hidden_units, num_bins, seed=0, tile_b=4096):
    nbt = N_TR * num_bins

    # Flow chain orders: perm_i rolled by 1 before each main layer.
    orders = []
    perm_i = np.arange(DIM, dtype=int)
    for _ in range(depth):
        perm_i = np.roll(perm_i, 1)
        orders.append([int(v) for v in perm_i])
    orders.append([int(v) for v in perm_i])       # final main_layer(perm_i)

    # RandomPermutations between main layers (fixed, deterministic); last = None
    rng = np.random.RandomState(seed)
    perms = [[int(v) for v in rng.permutation(DIM)] for _ in range(depth)] + [None]

    id_lists = [o[:N_ID] for o in orders]
    tr_lists = [o[N_ID:] for o in orders]

    # Per-layer MLP weights, packed & pre-transposed for the feature-major kernel.
    key = jax.random.PRNGKey(seed)
    w1t_l, b1_l, w2t_l, b2_l = [], [], [], []
    for _ in range(depth + 1):
        key, k1, k2, k3, k4 = jax.random.split(key, 5)
        w1 = jax.random.normal(k1, (N_ID, hidden_units), jnp.float32) / math.sqrt(N_ID)
        w2 = jax.random.normal(k2, (hidden_units, nbt), jnp.float32) * 0.01
        b1 = jax.random.normal(k3, (hidden_units, 1), jnp.float32) * 0.01
        b2 = jax.random.normal(k4, (nbt, 1), jnp.float32) * 0.01
        w1t_l.append(w1.T); b1_l.append(b1)
        w2t_l.append(w2.T); b2_l.append(b2)
    params = {
        "w1t": jnp.stack(w1t_l),   # (L, H, N_ID)
        "b1": jnp.stack(b1_l),     # (L, H, 1)
        "w2t": jnp.stack(w2t_l),   # (L, nbt, H)
        "b2": jnp.stack(b2_l),     # (L, nbt, 1)
    }

    kernel = _make_fused_kernel(num_bins, id_lists, tr_lists, perms)

    def forward(x, params):
        b = x.shape[0]
        # Lane-dense batch tiling; aim for >=2 grid steps when the batch allows
        # it (v7x has 2 TensorCores; also pipelines DMA with compute).
        tb = min(tile_b, max(128, _round_up((b + 1) // 2, 128)))
        bp = _round_up(b, tb)
        xt = jnp.transpose(x.astype(jnp.float32))          # (6, B) — cheap, outside
        if bp != b:
            xt = jnp.pad(xt, ((0, 0), (0, bp - b)))

        weight_args = (params["w1t"], params["b1"], params["w2t"], params["b2"])
        in_specs = [pl.BlockSpec((DIM, tb), lambda i: (0, i))]
        for w in weight_args:
            # constant index_map -> weights stay VMEM-resident across grid steps
            in_specs.append(pl.BlockSpec(w.shape, lambda i: (0, 0, 0)))

        out = pl.pallas_call(
            kernel,
            out_shape=jax.ShapeDtypeStruct((DIM, bp), jnp.float32),
            grid_spec=pltpu.PrefetchScalarGridSpec(
                num_scalar_prefetch=0,
                grid=(bp // tb,),
                in_specs=in_specs,
                out_specs=pl.BlockSpec((DIM, tb), lambda i: (0, i)),
            ),
            compiler_params=pltpu.CompilerParams(
                dimension_semantics=("parallel",),
                vmem_limit_bytes=32 * 1024 * 1024,
            ),
        )(xt, *weight_args)
        return jnp.transpose(out[:, :b])                    # back to (B, 6)

    def reference(x, params):
        return _reference_forward(x, params, num_bins, id_lists, tr_lists, perms)

    return forward, reference, params


if __name__ == "__main__":
    # Small config consistent with the module (dim fixed at 6).
    DEPTH, HIDDEN, BINS = 3, 32, 16
    BATCH = 8

    forward, reference, params = build_se3_neural_flows(DEPTH, HIDDEN, BINS, seed=0)

    key = jax.random.PRNGKey(0)
    # x: (B, 6) — first 3 dims translation-like, last 3 rotation-vector-like.
    x = jax.random.uniform(key, (BATCH, DIM), jnp.float32, minval=-2.0, maxval=2.0)

    fwd = jax.jit(forward)
    z = fwd(x, params)
    jax.block_until_ready(z)

    assert z.shape == (BATCH, DIM) and z.dtype == jnp.float32
    assert bool(jnp.all(jnp.isfinite(z)))

    # sanity check against the pure-JAX reference
    z_ref = reference(x, params)
    np.testing.assert_allclose(np.asarray(z), np.asarray(z_ref), atol=1e-2, rtol=1e-2)

    print("KERNEL_OK")
</pallas_src>

<mosaic_0001>
module attributes {stable_mosaic.version = 11 : i64} {
  func.func @kernel(%arg0: i32, %arg1: memref<6x128xf32, #tpu.memory_space<vmem>>, %arg2: memref<4x32x3xf32, #tpu.memory_space<vmem>>, %arg3: memref<4x32x1xf32, #tpu.memory_space<vmem>>, %arg4: memref<4x48x32xf32, #tpu.memory_space<vmem>>, %arg5: memref<4x48x1xf32, #tpu.memory_space<vmem>>, %arg6: memref<6x128xf32, #tpu.memory_space<vmem>>) attributes {dimension_semantics = [#tpu.dimension_semantics<parallel>], iteration_bounds = array<i64: 1>, scalar_prefetch = 0 : i64, scratch_operands = 0 : i64, tpu.core_type = #tpu.core_type<tc>, window_params = [{transform_indices = @transform_0, window_bounds = array<i64: 6, 128>}, {pipeline_mode = #tpu.pipeline_mode<synchronous>, transform_indices = @transform_1, window_bounds = array<i64: 4, 32, 3>}, {pipeline_mode = #tpu.pipeline_mode<synchronous>, transform_indices = @transform_2, window_bounds = array<i64: 4, 32, 1>}, {pipeline_mode = #tpu.pipeline_mode<synchronous>, transform_indices = @transform_3, window_bounds = array<i64: 4, 48, 32>}, {pipeline_mode = #tpu.pipeline_mode<synchronous>, transform_indices = @transform_4, window_bounds = array<i64: 4, 48, 1>}, {transform_indices = @transform_5, window_bounds = array<i64: 6, 128>}]} {
    %0 = tpu.iota {dimensions = array<i32: 0>} : vector<16x1xi32>
    %1 = arith.sitofp %0 : vector<16x1xi32> to vector<16x1xf32>
    %c0 = arith.constant 0 : index
    %c0_0 = arith.constant 0 : index
    %2 = vector.load %arg1[%c0, %c0_0] : memref<6x128xf32, #tpu.memory_space<vmem>>, vector<6x128xf32>
    %3 = vector.extract_strided_slice %2 {offsets = [0, 0], sizes = [3, 128], strides = [1, 1]} : vector<6x128xf32> to vector<3x128xf32>
    %cst = arith.constant -1.000000e+00 : f32
    %cst_1 = arith.constant 1.000000e+00 : f32
    %4 = vector.broadcast %cst : f32 to vector<3x128xf32>
    %5 = arith.maximumf %4, %3 : vector<3x128xf32>
    %6 = vector.broadcast %cst_1 : f32 to vector<3x128xf32>
    %7 = arith.minimumf %6, %5 : vector<3x128xf32>
    %8 = vector.extract_strided_slice %2 {offsets = [3, 0], sizes = [3, 128], strides = [1, 1]} : vector<6x128xf32> to vector<3x128xf32>
    %cst_2 = arith.constant 0.318309873 : f32
    %9 = vector.broadcast %cst_2 : f32 to vector<3x128xf32>
    %10 = arith.mulf %8, %9 : vector<3x128xf32>
    %11 = vector.extract_strided_slice %10 {offsets = [0, 0], sizes = [1, 128], strides = [1, 1]} : vector<3x128xf32> to vector<1x128xf32>
    %12 = vector.extract_strided_slice %10 {offsets = [0, 0], sizes = [1, 128], strides = [1, 1]} : vector<3x128xf32> to vector<1x128xf32>
    %13 = arith.mulf %11, %12 : vector<1x128xf32>
    %14 = vector.extract_strided_slice %10 {offsets = [1, 0], sizes = [1, 128], strides = [1, 1]} : vector<3x128xf32> to vector<1x128xf32>
    %15 = vector.extract_strided_slice %10 {offsets = [1, 0], sizes = [1, 128], strides = [1, 1]} : vector<3x128xf32> to vector<1x128xf32>
    %16 = arith.mulf %14, %15 : vector<1x128xf32>
    %17 = arith.addf %13, %16 : vector<1x128xf32>
    %18 = vector.extract_strided_slice %10 {offsets = [2, 0], sizes = [1, 128], strides = [1, 1]} : vector<3x128xf32> to vector<1x128xf32>
    %19 = vector.extract_strided_slice %10 {offsets = [2, 0], sizes = [1, 128], strides = [1, 1]} : vector<3x128xf32> to vector<1x128xf32>
    %20 = arith.mulf %18, %19 : vector<1x128xf32>
    %21 = arith.addf %17, %20 : vector<1x128xf32>
    %cst_3 = arith.constant 1.000000e+00 : f32
    %22 = vector.broadcast %cst_3 : f32 to vector<1x128xf32>
    %23 = arith.cmpf olt, %21, %22 : vector<1x128xf32>
    %cst_4 = arith.constant 1.000000e+00 : f32
    %24 = vector.broadcast %cst_4 : f32 to vector<1x128xf32>
    %25 = arith.subf %24, %21 : vector<1x128xf32>
    %cst_5 = arith.constant 1.000000e+00 : f32
    %26 = vector.broadcast %cst_5 : f32 to vector<1x128xf32>
    %27 = arith.select %23, %25, %26 : vector<1x128xi1>, vector<1x128xf32>
    %28 = math.rsqrt %27 : vector<1x128xf32>
    %29 = vector.broadcast %28 : vector<1x128xf32> to vector<3x128xf32>
    %30 = arith.mulf %10, %29 : vector<3x128xf32>
    %31 = math.absf %30 : vector<3x128xf32>
    %cst_6 = arith.constant 1.000000e+00 : f32
    %32 = vector.broadcast %cst_6 : f32 to vector<3x128xf32>
    %33 = arith.cmpf ogt, %31, %32 : vector<3x128xf32>
    %cst_7 = arith.constant 1.000000e+00 : f32
    %34 = vector.broadcast %cst_7 : f32 to vector<3x128xf32>
    %35 = arith.maximumf %31, %34 : vector<3x128xf32>
    %cst_8 = arith.constant 1.000000e+00 : f32
    %36 = vector.broadcast %cst_8 : f32 to vector<3x128xf32>
    %37 = arith.divf %36, %35 : vector<3x128xf32>
    %38 = arith.select %33, %37, %31 : vector<3x128xi1>, vector<3x128xf32>
    %39 = arith.mulf %38, %38 : vector<3x128xf32>
    %cst_9 = arith.constant -1.172120e-02 : f32
    %40 = vector.broadcast %cst_9 : f32 to vector<3x128xf32>
    %41 = arith.mulf %40, %39 : vector<3x128xf32>
    %cst_10 = arith.constant 0.0526533201 : f32
    %42 = vector.broadcast %cst_10 : f32 to vector<3x128xf32>
    %43 = arith.addf %41, %42 : vector<3x128xf32>
    %44 = arith.mulf %43, %39 : vector<3x128xf32>
    %cst_11 = arith.constant 0.116432868 : f32
    %45 = vector.broadcast %cst_11 : f32 to vector<3x128xf32>
    %46 = arith.subf %44, %45 : vector<3x128xf32>
    %47 = arith.mulf %46, %39 : vector<3x128xf32>
    %cst_12 = arith.constant 0.193543464 : f32
    %48 = vector.broadcast %cst_12 : f32 to vector<3x128xf32>
    %49 = arith.addf %47, %48 : vector<3x128xf32>
    %50 = arith.mulf %49, %39 : vector<3x128xf32>
    %cst_13 = arith.constant 0.332623482 : f32
    %51 = vector.broadcast %cst_13 : f32 to vector<3x128xf32>
    %52 = arith.subf %50, %51 : vector<3x128xf32>
    %53 = arith.mulf %52, %39 : vector<3x128xf32>
    %cst_14 = arith.constant 0.999977231 : f32
    %54 = vector.broadcast %cst_14 : f32 to vector<3x128xf32>
    %55 = arith.addf %53, %54 : vector<3x128xf32>
    %56 = arith.mulf %55, %38 : vector<3x128xf32>
    %cst_15 = arith.constant 1.57079637 : f32
    %57 = vector.broadcast %cst_15 : f32 to vector<3x128xf32>
    %58 = arith.subf %57, %56 : vector<3x128xf32>
    %59 = arith.select %33, %58, %56 : vector<3x128xi1>, vector<3x128xf32>
    %cst_16 = arith.constant 0.000000e+00 : f32
    %60 = vector.broadcast %cst_16 : f32 to vector<3x128xf32>
    %61 = arith.cmpf olt, %30, %60 : vector<3x128xf32>
    %cst_17 = arith.constant 0.000000e+00 : f32
    %62 = vector.broadcast %cst_17 : f32 to vector<3x128xf32>
    %63 = arith.subf %62, %59 : vector<3x128xf32>
    %64 = arith.select %61, %63, %59 : vector<3x128xi1>, vector<3x128xf32>
    %cst_18 = arith.constant 0.636619746 : f32
    %65 = vector.broadcast %cst_18 : f32 to vector<3x128xf32>
    %66 = arith.mulf %64, %65 : vector<3x128xf32>
    %cst_19 = arith.constant 0.000000e+00 : f32
    %67 = vector.shape_cast %23 : vector<1x128xi1> to vector<1x128xi1>
    %68 = vector.broadcast %67 : vector<1x128xi1> to vector<3x128xi1>
    %69 = vector.broadcast %cst_19 : f32 to vector<3x128xf32>
    %70 = arith.select %68, %66, %69 : vector<3x128xi1>, vector<3x128xf32>
    %71 = vector.extract_strided_slice %7 {offsets = [0, 0], sizes = [1, 128], strides = [1, 1]} : vector<3x128xf32> to vector<1x128xf32>
    %72 = vector.extract_strided_slice %7 {offsets = [1, 0], sizes = [1, 128], strides = [1, 1]} : vector<3x128xf32> to vector<1x128xf32>
    %73 = vector.extract_strided_slice %7 {offsets = [2, 0], sizes = [1, 128], strides = [1, 1]} : vector<3x128xf32> to vector<1x128xf32>
    %74 = vector.extract_strided_slice %70 {offsets = [0, 0], sizes = [1, 128], strides = [1, 1]} : vector<3x128xf32> to vector<1x128xf32>
    %75 = vector.extract_strided_slice %70 {offsets = [1, 0], sizes = [1, 128], strides = [1, 1]} : vector<3x128xf32> to vector<1x128xf32>
    %76 = vector.extract_strided_slice %70 {offsets = [2, 0], sizes = [1, 128], strides = [1, 1]} : vector<3x128xf32> to vector<1x128xf32>
    %c0_20 = arith.constant 0 : index
    %c0_21 = arith.constant 0 : index
    %c0_22 = arith.constant 0 : index
    %77 = vector.load %arg2[%c0_20, %c0_21, %c0_22] : memref<4x32x3xf32, #tpu.memory_space<vmem>>, vector<1x32x3xf32>
    %78 = vector.shape_cast %77 : vector<1x32x3xf32> to vector<32x3xf32>
    %c0_23 = arith.constant 0 : index
    %c0_24 = arith.constant 0 : index
    %c0_25 = arith.constant 0 : index
    %79 = vector.load %arg3[%c0_23, %c0_24, %c0_25] : memref<4x32x1xf32, #tpu.memory_space<vmem>>, vector<1x32x1xf32>
    %80 = vector.shape_cast %79 : vector<1x32x1xf32> to vector<32x1xf32>
    %c0_26 = arith.constant 0 : index
    %c0_27 = arith.constant 0 : index
    %c0_28 = arith.constant 0 : index
    %81 = vector.load %arg4[%c0_26, %c0_27, %c0_28] : memref<4x48x32xf32, #tpu.memory_space<vmem>>, vector<1x48x32xf32>
    %82 = vector.shape_cast %81 : vector<1x48x32xf32> to vector<48x32xf32>
    %c0_29 = arith.constant 0 : index
    %c0_30 = arith.constant 0 : index
    %c0_31 = arith.constant 0 : index
    %83 = vector.load %arg5[%c0_29, %c0_30, %c0_31] : memref<4x48x1xf32, #tpu.memory_space<vmem>>, vector<1x48x1xf32>
    %84 = vector.shape_cast %83 : vector<1x48x1xf32> to vector<48x1xf32>
    %85 = vector.extract_strided_slice %78 {offsets = [0, 0], sizes = [32, 1], strides = [1, 1]} : vector<32x3xf32> to vector<32x1xf32>
    %86 = vector.broadcast %85 : vector<32x1xf32> to vector<32x128xf32>
    %87 = vector.broadcast %76 : vector<1x128xf32> to vector<32x128xf32>
    %88 = arith.mulf %86, %87 : vector<32x128xf32>
    %89 = vector.broadcast %80 : vector<32x1xf32> to vector<32x128xf32>
    %90 = arith.addf %89, %88 : vector<32x128xf32>
    %91 = vector.extract_strided_slice %78 {offsets = [0, 1], sizes = [32, 1], strides = [1, 1]} : vector<32x3xf32> to vector<32x1xf32>
    %92 = vector.broadcast %91 : vector<32x1xf32> to vector<32x128xf32>
    %93 = vector.broadcast %71 : vector<1x128xf32> to vector<32x128xf32>
    %94 = arith.mulf %92, %93 : vector<32x128xf32>
    %95 = arith.addf %90, %94 : vector<32x128xf32>
    %96 = vector.extract_strided_slice %78 {offsets = [0, 2], sizes = [32, 1], strides = [1, 1]} : vector<32x3xf32> to vector<32x1xf32>
    %97 = vector.broadcast %96 : vector<32x1xf32> to vector<32x128xf32>
    %98 = vector.broadcast %72 : vector<1x128xf32> to vector<32x128xf32>
    %99 = arith.mulf %97, %98 : vector<32x128xf32>
    %100 = arith.addf %95, %99 : vector<32x128xf32>
    %cst_32 = arith.constant 0.000000e+00 : f32
    %101 = vector.broadcast %cst_32 : f32 to vector<32x128xf32>
    %102 = arith.maximumf %100, %101 : vector<32x128xf32>
    %cst_33 = arith.constant dense<0.000000e+00> : vector<48x128xf32>
    %103 = tpu.matmul %82, %102, %cst_33 {dimension_numbers = #tpu.dot_dimension_numbers<[1], [0], [0], [1], [0, 0, 1, 1], [], []>} : vector<48x32xf32>, vector<32x128xf32>, vector<48x128xf32> -> vector<48x128xf32>
    %104 = vector.broadcast %84 : vector<48x1xf32> to vector<48x128xf32>
    %105 = arith.addf %103, %104 : vector<48x128xf32>
    %106 = vector.extract_strided_slice %105 {offsets = [0, 0], sizes = [16, 128], strides = [1, 1]} : vector<48x128xf32> to vector<16x128xf32>
    %cst_34 = arith.constant dense<0xFF800000> : vector<128xf32>
    %107 = vector.multi_reduction <maximumf>, %106, %cst_34 [0] : vector<16x128xf32> to vector<128xf32>
    %108 = vector.shape_cast %107 : vector<128xf32> to vector<1x128xf32>
    %109 = vector.broadcast %108 : vector<1x128xf32> to vector<16x128xf32>
    %110 = arith.subf %106, %109 : vector<16x128xf32>
    %111 = math.exp %110 : vector<16x128xf32>
    %cst_35 = arith.constant -1.000000e+00 : f32
    %112 = vector.broadcast %cst_35 : f32 to vector<1x128xf32>
    %113 = arith.cmpf oge, %73, %112 : vector<1x128xf32>
    %cst_36 = arith.constant 1.000000e+00 : f32
    %114 = vector.broadcast %cst_36 : f32 to vector<1x128xf32>
    %115 = arith.cmpf ole, %73, %114 : vector<1x128xf32>
    %116 = arith.andi %113, %115 : vector<1x128xi1>
    %cst_37 = arith.constant 1.000000e+00 : f32
    %117 = vector.broadcast %cst_37 : f32 to vector<1x128xf32>
    %118 = arith.addf %73, %117 : vector<1x128xf32>
    %cst_38 = arith.constant 5.000000e-01 : f32
    %119 = vector.broadcast %cst_38 : f32 to vector<1x128xf32>
    %120 = arith.mulf %118, %119 : vector<1x128xf32>
    %cst_39 = arith.constant 0.000000e+00 : f32
    %cst_40 = arith.constant 1.000000e+00 : f32
    %121 = vector.broadcast %cst_39 : f32 to vector<1x128xf32>
    %122 = arith.maximumf %121, %120 : vector<1x128xf32>
    %123 = vector.broadcast %cst_40 : f32 to vector<1x128xf32>
    %124 = arith.minimumf %123, %122 : vector<1x128xf32>
    %cst_41 = arith.constant 1.600000e+01 : f32
    %125 = vector.broadcast %cst_41 : f32 to vector<1x128xf32>
    %126 = arith.mulf %124, %125 : vector<1x128xf32>
    %127 = vector.broadcast %126 : vector<1x128xf32> to vector<16x128xf32>
    %128 = vector.broadcast %1 : vector<16x1xf32> to vector<16x128xf32>
    %129 = arith.subf %127, %128 : vector<16x128xf32>
    %cst_42 = arith.constant 0.000000e+00 : f32
    %cst_43 = arith.constant 1.000000e+00 : f32
    %130 = vector.broadcast %cst_42 : f32 to vector<16x128xf32>
    %131 = arith.maximumf %130, %129 : vector<16x128xf32>
    %132 = vector.broadcast %cst_43 : f32 to vector<16x128xf32>
    %133 = arith.minimumf %132, %131 : vector<16x128xf32>
    %134 = arith.mulf %111, %133 : vector<16x128xf32>
    %cst_44 = arith.constant dense<0.000000e+00> : vector<128xf32>
    %135 = vector.multi_reduction <add>, %134, %cst_44 [0] : vector<16x128xf32> to vector<128xf32>
    %136 = vector.shape_cast %135 : vector<128xf32> to vector<1x128xf32>
    %cst_45 = arith.constant dense<0.000000e+00> : vector<128xf32>
    %137 = vector.multi_reduction <add>, %111, %cst_45 [0] : vector<16x128xf32> to vector<128xf32>
    %138 = vector.shape_cast %137 : vector<128xf32> to vector<1x128xf32>
    %139 = tpu.reciprocal %138 {approx = true} : vector<1x128xf32> -> vector<1x128xf32>
    %140 = arith.mulf %136, %139 : vector<1x128xf32>
    %cst_46 = arith.constant 2.000000e+00 : f32
    %141 = vector.broadcast %cst_46 : f32 to vector<1x128xf32>
    %142 = arith.mulf %140, %141 : vector<1x128xf32>
    %cst_47 = arith.constant 1.000000e+00 : f32
    %143 = vector.broadcast %cst_47 : f32 to vector<1x128xf32>
    %144 = arith.subf %142, %143 : vector<1x128xf32>
    %145 = arith.select %116, %144, %73 : vector<1x128xi1>, vector<1x128xf32>
    %146 = vector.extract_strided_slice %105 {offsets = [16, 0], sizes = [16, 128], strides = [1, 1]} : vector<48x128xf32> to vector<16x128xf32>
    %cst_48 = arith.constant dense<0xFF800000> : vector<128xf32>
    %147 = vector.multi_reduction <maximumf>, %146, %cst_48 [0] : vector<16x128xf32> to vector<128xf32>
    %148 = vector.shape_cast %147 : vector<128xf32> to vector<1x128xf32>
    %149 = vector.broadcast %148 : vector<1x128xf32> to vector<16x128xf32>
    %150 = arith.subf %146, %149 : vector<16x128xf32>
    %151 = math.exp %150 : vector<16x128xf32>
    %cst_49 = arith.constant -1.000000e+00 : f32
    %152 = vector.broadcast %cst_49 : f32 to vector<1x128xf32>
    %153 = arith.cmpf oge, %74, %152 : vector<1x128xf32>
    %cst_50 = arith.constant 1.000000e+00 : f32
    %154 = vector.broadcast %cst_50 : f32 to vector<1x128xf32>
    %155 = arith.cmpf ole, %74, %154 : vector<1x128xf32>
    %156 = arith.andi %153, %155 : vector<1x128xi1>
    %cst_51 = arith.constant 1.000000e+00 : f32
    %157 = vector.broadcast %cst_51 : f32 to vector<1x128xf32>
    %158 = arith.addf %74, %157 : vector<1x128xf32>
    %cst_52 = arith.constant 5.000000e-01 : f32
    %159 = vector.broadcast %cst_52 : f32 to vector<1x128xf32>
    %160 = arith.mulf %158, %159 : vector<1x128xf32>
    %cst_53 = arith.constant 0.000000e+00 : f32
    %cst_54 = arith.constant 1.000000e+00 : f32
    %161 = vector.broadcast %cst_53 : f32 to vector<1x128xf32>
    %162 = arith.maximumf %161, %160 : vector<1x128xf32>
    %163 = vector.broadcast %cst_54 : f32 to vector<1x128xf32>
    %164 = arith.minimumf %163, %162 : vector<1x128xf32>
    %cst_55 = arith.constant 1.600000e+01 : f32
    %165 = vector.broadcast %cst_55 : f32 to vector<1x128xf32>
    %166 = arith.mulf %164, %165 : vector<1x128xf32>
    %167 = vector.broadcast %166 : vector<1x128xf32> to vector<16x128xf32>
    %168 = vector.broadcast %1 : vector<16x1xf32> to vector<16x128xf32>
    %169 = arith.subf %167, %168 : vector<16x128xf32>
    %cst_56 = arith.constant 0.000000e+00 : f32
    %cst_57 = arith.constant 1.000000e+00 : f32
    %170 = vector.broadcast %cst_56 : f32 to vector<16x128xf32>
    %171 = arith.maximumf %170, %169 : vector<16x128xf32>
    %172 = vector.broadcast %cst_57 : f32 to vector<16x128xf32>
    %173 = arith.minimumf %172, %171 : vector<16x128xf32>
    %174 = arith.mulf %151, %173 : vector<16x128xf32>
    %cst_58 = arith.constant dense<0.000000e+00> : vector<128xf32>
    %175 = vector.multi_reduction <add>, %174, %cst_58 [0] : vector<16x128xf32> to vector<128xf32>
    %176 = vector.shape_cast %175 : vector<128xf32> to vector<1x128xf32>
    %cst_59 = arith.constant dense<0.000000e+00> : vector<128xf32>
    %177 = vector.multi_reduction <add>, %151, %cst_59 [0] : vector<16x128xf32> to vector<128xf32>
    %178 = vector.shape_cast %177 : vector<128xf32> to vector<1x128xf32>
    %179 = tpu.reciprocal %178 {approx = true} : vector<1x128xf32> -> vector<1x128xf32>
    %180 = arith.mulf %176, %179 : vector<1x128xf32>
    %cst_60 = arith.constant 2.000000e+00 : f32
    %181 = vector.broadcast %cst_60 : f32 to vector<1x128xf32>
    %182 = arith.mulf %180, %181 : vector<1x128xf32>
    %cst_61 = arith.constant 1.000000e+00 : f32
    %183 = vector.broadcast %cst_61 : f32 to vector<1x128xf32>
    %184 = arith.subf %182, %183 : vector<1x128xf32>
    %185 = arith.select %156, %184, %74 : vector<1x128xi1>, vector<1x128xf32>
    %186 = vector.extract_strided_slice %105 {offsets = [32, 0], sizes = [16, 128], strides = [1, 1]} : vector<48x128xf32> to vector<16x128xf32>
    %cst_62 = arith.constant dense<0xFF800000> : vector<128xf32>
    %187 = vector.multi_reduction <maximumf>, %186, %cst_62 [0] : vector<16x128xf32> to vector<128xf32>
    %188 = vector.shape_cast %187 : vector<128xf32> to vector<1x128xf32>
    %189 = vector.broadcast %188 : vector<1x128xf32> to vector<16x128xf32>
    %190 = arith.subf %186, %189 : vector<16x128xf32>
    %191 = math.exp %190 : vector<16x128xf32>
    %cst_63 = arith.constant -1.000000e+00 : f32
    %192 = vector.broadcast %cst_63 : f32 to vector<1x128xf32>
    %193 = arith.cmpf oge, %75, %192 : vector<1x128xf32>
    %cst_64 = arith.constant 1.000000e+00 : f32
    %194 = vector.broadcast %cst_64 : f32 to vector<1x128xf32>
    %195 = arith.cmpf ole, %75, %194 : vector<1x128xf32>
    %196 = arith.andi %193, %195 : vector<1x128xi1>
    %cst_65 = arith.constant 1.000000e+00 : f32
    %197 = vector.broadcast %cst_65 : f32 to vector<1x128xf32>
    %198 = arith.addf %75, %197 : vector<1x128xf32>
    %cst_66 = arith.constant 5.000000e-01 : f32
    %199 = vector.broadcast %cst_66 : f32 to vector<1x128xf32>
    %200 = arith.mulf %198, %199 : vector<1x128xf32>
    %cst_67 = arith.constant 0.000000e+00 : f32
    %cst_68 = arith.constant 1.000000e+00 : f32
    %201 = vector.broadcast %cst_67 : f32 to vector<1x128xf32>
    %202 = arith.maximumf %201, %200 : vector<1x128xf32>
    %203 = vector.broadcast %cst_68 : f32 to vector<1x128xf32>
    %204 = arith.minimumf %203, %202 : vector<1x128xf32>
    %cst_69 = arith.constant 1.600000e+01 : f32
    %205 = vector.broadcast %cst_69 : f32 to vector<1x128xf32>
    %206 = arith.mulf %204, %205 : vector<1x128xf32>
    %207 = vector.broadcast %206 : vector<1x128xf32> to vector<16x128xf32>
    %208 = vector.broadcast %1 : vector<16x1xf32> to vector<16x128xf32>
    %209 = arith.subf %207, %208 : vector<16x128xf32>
    %cst_70 = arith.constant 0.000000e+00 : f32
    %cst_71 = arith.constant 1.000000e+00 : f32
    %210 = vector.broadcast %cst_70 : f32 to vector<16x128xf32>
    %211 = arith.maximumf %210, %209 : vector<16x128xf32>
    %212 = vector.broadcast %cst_71 : f32 to vector<16x128xf32>
    %213 = arith.minimumf %212, %211 : vector<16x128xf32>
    %214 = arith.mulf %191, %213 : vector<16x128xf32>
    %cst_72 = arith.constant dense<0.000000e+00> : vector<128xf32>
    %215 = vector.multi_reduction <add>, %214, %cst_72 [0] : vector<16x128xf32> to vector<128xf32>
    %216 = vector.shape_cast %215 : vector<128xf32> to vector<1x128xf32>
    %cst_73 = arith.constant dense<0.000000e+00> : vector<128xf32>
    %217 = vector.multi_reduction <add>, %191, %cst_73 [0] : vector<16x128xf32> to vector<128xf32>
    %218 = vector.shape_cast %217 : vector<128xf32> to vector<1x128xf32>
    %219 = tpu.reciprocal %218 {approx = true} : vector<1x128xf32> -> vector<1x128xf32>
    %220 = arith.mulf %216, %219 : vector<1x128xf32>
    %cst_74 = arith.constant 2.000000e+00 : f32
    %221 = vector.broadcast %cst_74 : f32 to vector<1x128xf32>
    %222 = arith.mulf %220, %221 : vector<1x128xf32>
    %cst_75 = arith.constant 1.000000e+00 : f32
    %223 = vector.broadcast %cst_75 : f32 to vector<1x128xf32>
    %224 = arith.subf %222, %223 : vector<1x128xf32>
    %225 = arith.select %196, %224, %75 : vector<1x128xi1>, vector<1x128xf32>
    %c1 = arith.constant 1 : index
    %c0_76 = arith.constant 0 : index
    %c0_77 = arith.constant 0 : index
    %226 = vector.load %arg2[%c1, %c0_76, %c0_77] : memref<4x32x3xf32, #tpu.memory_space<vmem>>, vector<1x32x3xf32>
    %227 = vector.shape_cast %226 : vector<1x32x3xf32> to vector<32x3xf32>
    %c1_78 = arith.constant 1 : index
    %c0_79 = arith.constant 0 : index
    %c0_80 = arith.constant 0 : index
    %228 = vector.load %arg3[%c1_78, %c0_79, %c0_80] : memref<4x32x1xf32, #tpu.memory_space<vmem>>, vector<1x32x1xf32>
    %229 = vector.shape_cast %228 : vector<1x32x1xf32> to vector<32x1xf32>
    %c1_81 = arith.constant 1 : index
    %c0_82 = arith.constant 0 : index
    %c0_83 = arith.constant 0 : index
    %230 = vector.load %arg4[%c1_81, %c0_82, %c0_83] : memref<4x48x32xf32, #tpu.memory_space<vmem>>, vector<1x48x32xf32>
    %231 = vector.shape_cast %230 : vector<1x48x32xf32> to vector<48x32xf32>
    %c1_84 = arith.constant 1 : index
    %c0_85 = arith.constant 0 : index
    %c0_86 = arith.constant 0 : index
    %232 = vector.load %arg5[%c1_84, %c0_85, %c0_86] : memref<4x48x1xf32, #tpu.memory_space<vmem>>, vector<1x48x1xf32>
    %233 = vector.shape_cast %232 : vector<1x48x1xf32> to vector<48x1xf32>
    %234 = vector.extract_strided_slice %227 {offsets = [0, 0], sizes = [32, 1], strides = [1, 1]} : vector<32x3xf32> to vector<32x1xf32>
    %235 = vector.broadcast %234 : vector<32x1xf32> to vector<32x128xf32>
    %236 = vector.broadcast %71 : vector<1x128xf32> to vector<32x128xf32>
    %237 = arith.mulf %235, %236 : vector<32x128xf32>
    %238 = vector.broadcast %229 : vector<32x1xf32> to vector<32x128xf32>
    %239 = arith.addf %238, %237 : vector<32x128xf32>
    %240 = vector.extract_strided_slice %227 {offsets = [0, 1], sizes = [32, 1], strides = [1, 1]} : vector<32x3xf32> to vector<32x1xf32>
    %241 = vector.broadcast %240 : vector<32x1xf32> to vector<32x128xf32>
    %242 = vector.broadcast %225 : vector<1x128xf32> to vector<32x128xf32>
    %243 = arith.mulf %241, %242 : vector<32x128xf32>
    %244 = arith.addf %239, %243 : vector<32x128xf32>
    %245 = vector.extract_strided_slice %227 {offsets = [0, 2], sizes = [32, 1], strides = [1, 1]} : vector<32x3xf32> to vector<32x1xf32>
    %246 = vector.broadcast %245 : vector<32x1xf32> to vector<32x128xf32>
    %247 = vector.broadcast %76 : vector<1x128xf32> to vector<32x128xf32>
    %248 = arith.mulf %246, %247 : vector<32x128xf32>
    %249 = arith.addf %244, %248 : vector<32x128xf32>
    %cst_87 = arith.constant 0.000000e+00 : f32
    %250 = vector.broadcast %cst_87 : f32 to vector<32x128xf32>
    %251 = arith.maximumf %249, %250 : vector<32x128xf32>
    %cst_88 = arith.constant dense<0.000000e+00> : vector<48x128xf32>
    %252 = tpu.matmul %231, %251, %cst_88 {dimension_numbers = #tpu.dot_dimension_numbers<[1], [0], [0], [1], [0, 0, 1, 1], [], []>} : vector<48x32xf32>, vector<32x128xf32>, vector<48x128xf32> -> vector<48x128xf32>
    %253 = vector.broadcast %233 : vector<48x1xf32> to vector<48x128xf32>
    %254 = arith.addf %252, %253 : vector<48x128xf32>
    %255 = vector.extract_strided_slice %254 {offsets = [0, 0], sizes = [16, 128], strides = [1, 1]} : vector<48x128xf32> to vector<16x128xf32>
    %cst_89 = arith.constant dense<0xFF800000> : vector<128xf32>
    %256 = vector.multi_reduction <maximumf>, %255, %cst_89 [0] : vector<16x128xf32> to vector<128xf32>
    %257 = vector.shape_cast %256 : vector<128xf32> to vector<1x128xf32>
    %258 = vector.broadcast %257 : vector<1x128xf32> to vector<16x128xf32>
    %259 = arith.subf %255, %258 : vector<16x128xf32>
    %260 = math.exp %259 : vector<16x128xf32>
    %cst_90 = arith.constant -1.000000e+00 : f32
    %261 = vector.broadcast %cst_90 : f32 to vector<1x128xf32>
    %262 = arith.cmpf oge, %145, %261 : vector<1x128xf32>
    %cst_91 = arith.constant 1.000000e+00 : f32
    %263 = vector.broadcast %cst_91 : f32 to vector<1x128xf32>
    %264 = arith.cmpf ole, %145, %263 : vector<1x128xf32>
    %265 = arith.andi %262, %264 : vector<1x128xi1>
    %cst_92 = arith.constant 1.000000e+00 : f32
    %266 = vector.broadcast %cst_92 : f32 to vector<1x128xf32>
    %267 = arith.addf %145, %266 : vector<1x128xf32>
    %cst_93 = arith.constant 5.000000e-01 : f32
    %268 = vector.broadcast %cst_93 : f32 to vector<1x128xf32>
    %269 = arith.mulf %267, %268 : vector<1x128xf32>
    %cst_94 = arith.constant 0.000000e+00 : f32
    %cst_95 = arith.constant 1.000000e+00 : f32
    %270 = vector.broadcast %cst_94 : f32 to vector<1x128xf32>
    %271 = arith.maximumf %270, %269 : vector<1x128xf32>
    %272 = vector.broadcast %cst_95 : f32 to vector<1x128xf32>
    %273 = arith.minimumf %272, %271 : vector<1x128xf32>
    %cst_96 = arith.constant 1.600000e+01 : f32
    %274 = vector.broadcast %cst_96 : f32 to vector<1x128xf32>
    %275 = arith.mulf %273, %274 : vector<1x128xf32>
    %276 = vector.broadcast %275 : vector<1x128xf32> to vector<16x128xf32>
    %277 = vector.broadcast %1 : vector<16x1xf32> to vector<16x128xf32>
    %278 = arith.subf %276, %277 : vector<16x128xf32>
    %cst_97 = arith.constant 0.000000e+00 : f32
    %cst_98 = arith.constant 1.000000e+00 : f32
    %279 = vector.broadcast %cst_97 : f32 to vector<16x128xf32>
    %280 = arith.maximumf %279, %278 : vector<16x128xf32>
    %281 = vector.broadcast %cst_98 : f32 to vector<16x128xf32>
    %282 = arith.minimumf %281, %280 : vector<16x128xf32>
    %283 = arith.mulf %260, %282 : vector<16x128xf32>
    %cst_99 = arith.constant dense<0.000000e+00> : vector<128xf32>
    %284 = vector.multi_reduction <add>, %283, %cst_99 [0] : vector<16x128xf32> to vector<128xf32>
    %285 = vector.shape_cast %284 : vector<128xf32> to vector<1x128xf32>
    %cst_100 = arith.constant dense<0.000000e+00> : vector<128xf32>
    %286 = vector.multi_reduction <add>, %260, %cst_100 [0] : vector<16x128xf32> to vector<128xf32>
    %287 = vector.shape_cast %286 : vector<128xf32> to vector<1x128xf32>
    %288 = tpu.reciprocal %287 {approx = true} : vector<1x128xf32> -> vector<1x128xf32>
    %289 = arith.mulf %285, %288 : vector<1x128xf32>
    %cst_101 = arith.constant 2.000000e+00 : f32
    %290 = vector.broadcast %cst_101 : f32 to vector<1x128xf32>
    %291 = arith.mulf %289, %290 : vector<1x128xf32>
    %cst_102 = arith.constant 1.000000e+00 : f32
    %292 = vector.broadcast %cst_102 : f32 to vector<1x128xf32>
    %293 = arith.subf %291, %292 : vector<1x128xf32>
    %294 = arith.select %265, %293, %145 : vector<1x128xi1>, vector<1x128xf32>
    %295 = vector.extract_strided_slice %254 {offsets = [16, 0], sizes = [16, 128], strides = [1, 1]} : vector<48x128xf32> to vector<16x128xf32>
    %cst_103 = arith.constant dense<0xFF800000> : vector<128xf32>
    %296 = vector.multi_reduction <maximumf>, %295, %cst_103 [0] : vector<16x128xf32> to vector<128xf32>
    %297 = vector.shape_cast %296 : vector<128xf32> to vector<1x128xf32>
    %298 = vector.broadcast %297 : vector<1x128xf32> to vector<16x128xf32>
    %299 = arith.subf %295, %298 : vector<16x128xf32>
    %300 = math.exp %299 : vector<16x128xf32>
    %cst_104 = arith.constant -1.000000e+00 : f32
    %301 = vector.broadcast %cst_104 : f32 to vector<1x128xf32>
    %302 = arith.cmpf oge, %72, %301 : vector<1x128xf32>
    %cst_105 = arith.constant 1.000000e+00 : f32
    %303 = vector.broadcast %cst_105 : f32 to vector<1x128xf32>
    %304 = arith.cmpf ole, %72, %303 : vector<1x128xf32>
    %305 = arith.andi %302, %304 : vector<1x128xi1>
    %cst_106 = arith.constant 1.000000e+00 : f32
    %306 = vector.broadcast %cst_106 : f32 to vector<1x128xf32>
    %307 = arith.addf %72, %306 : vector<1x128xf32>
    %cst_107 = arith.constant 5.000000e-01 : f32
    %308 = vector.broadcast %cst_107 : f32 to vector<1x128xf32>
    %309 = arith.mulf %307, %308 : vector<1x128xf32>
    %cst_108 = arith.constant 0.000000e+00 : f32
    %cst_109 = arith.constant 1.000000e+00 : f32
    %310 = vector.broadcast %cst_108 : f32 to vector<1x128xf32>
    %311 = arith.maximumf %310, %309 : vector<1x128xf32>
    %312 = vector.broadcast %cst_109 : f32 to vector<1x128xf32>
    %313 = arith.minimumf %312, %311 : vector<1x128xf32>
    %cst_110 = arith.constant 1.600000e+01 : f32
    %314 = vector.broadcast %cst_110 : f32 to vector<1x128xf32>
    %315 = arith.mulf %313, %314 : vector<1x128xf32>
    %316 = vector.broadcast %315 : vector<1x128xf32> to vector<16x128xf32>
    %317 = vector.broadcast %1 : vector<16x1xf32> to vector<16x128xf32>
    %318 = arith.subf %316, %317 : vector<16x128xf32>
    %cst_111 = arith.constant 0.000000e+00 : f32
    %cst_112 = arith.constant 1.000000e+00 : f32
    %319 = vector.broadcast %cst_111 : f32 to vector<16x128xf32>
    %320 = arith.maximumf %319, %318 : vector<16x128xf32>
    %321 = vector.broadcast %cst_112 : f32 to vector<16x128xf32>
    %322 = arith.minimumf %321, %320 : vector<16x128xf32>
    %323 = arith.mulf %300, %322 : vector<16x128xf32>
    %cst_113 = arith.constant dense<0.000000e+00> : vector<128xf32>
    %324 = vector.multi_reduction <add>, %323, %cst_113 [0] : vector<16x128xf32> to vector<128xf32>
    %325 = vector.shape_cast %324 : vector<128xf32> to vector<1x128xf32>
    %cst_114 = arith.constant dense<0.000000e+00> : vector<128xf32>
    %326 = vector.multi_reduction <add>, %300, %cst_114 [0] : vector<16x128xf32> to vector<128xf32>
    %327 = vector.shape_cast %326 : vector<128xf32> to vector<1x128xf32>
    %328 = tpu.reciprocal %327 {approx = true} : vector<1x128xf32> -> vector<1x128xf32>
    %329 = arith.mulf %325, %328 : vector<1x128xf32>
    %cst_115 = arith.constant 2.000000e+00 : f32
    %330 = vector.broadcast %cst_115 : f32 to vector<1x128xf32>
    %331 = arith.mulf %329, %330 : vector<1x128xf32>
    %cst_116 = arith.constant 1.000000e+00 : f32
    %332 = vector.broadcast %cst_116 : f32 to vector<1x128xf32>
    %333 = arith.subf %331, %332 : vector<1x128xf32>
    %334 = arith.select %305, %333, %72 : vector<1x128xi1>, vector<1x128xf32>
    %335 = vector.extract_strided_slice %254 {offsets = [32, 0], sizes = [16, 128], strides = [1, 1]} : vector<48x128xf32> to vector<16x128xf32>
    %cst_117 = arith.constant dense<0xFF800000> : vector<128xf32>
    %336 = vector.multi_reduction <maximumf>, %335, %cst_117 [0] : vector<16x128xf32> to vector<128xf32>
    %337 = vector.shape_cast %336 : vector<128xf32> to vector<1x128xf32>
    %338 = vector.broadcast %337 : vector<1x128xf32> to vector<16x128xf32>
    %339 = arith.subf %335, %338 : vector<16x128xf32>
    %340 = math.exp %339 : vector<16x128xf32>
    %cst_118 = arith.constant -1.000000e+00 : f32
    %341 = vector.broadcast %cst_118 : f32 to vector<1x128xf32>
    %342 = arith.cmpf oge, %185, %341 : vector<1x128xf32>
    %cst_119 = arith.constant 1.000000e+00 : f32
    %343 = vector.broadcast %cst_119 : f32 to vector<1x128xf32>
    %344 = arith.cmpf ole, %185, %343 : vector<1x128xf32>
    %345 = arith.andi %342, %344 : vector<1x128xi1>
    %cst_120 = arith.constant 1.000000e+00 : f32
    %346 = vector.broadcast %cst_120 : f32 to vector<1x128xf32>
    %347 = arith.addf %185, %346 : vector<1x128xf32>
    %cst_121 = arith.constant 5.000000e-01 : f32
    %348 = vector.broadcast %cst_121 : f32 to vector<1x128xf32>
    %349 = arith.mulf %347, %348 : vector<1x128xf32>
    %cst_122 = arith.constant 0.000000e+00 : f32
    %cst_123 = arith.constant 1.000000e+00 : f32
    %350 = vector.broadcast %cst_122 : f32 to vector<1x128xf32>
    %351 = arith.maximumf %350, %349 : vector<1x128xf32>
    %352 = vector.broadcast %cst_123 : f32 to vector<1x128xf32>
    %353 = arith.minimumf %352, %351 : vector<1x128xf32>
    %cst_124 = arith.constant 1.600000e+01 : f32
    %354 = vector.broadcast %cst_124 : f32 to vector<1x128xf32>
    %355 = arith.mulf %353, %354 : vector<1x128xf32>
    %356 = vector.broadcast %355 : vector<1x128xf32> to vector<16x128xf32>
    %357 = vector.broadcast %1 : vector<16x1xf32> to vector<16x128xf32>
    %358 = arith.subf %356, %357 : vector<16x128xf32>
    %cst_125 = arith.constant 0.000000e+00 : f32
    %cst_126 = arith.constant 1.000000e+00 : f32
    %359 = vector.broadcast %cst_125 : f32 to vector<16x128xf32>
    %360 = arith.maximumf %359, %358 : vector<16x128xf32>
    %361 = vector.broadcast %cst_126 : f32 to vector<16x128xf32>
    %362 = arith.minimumf %361, %360 : vector<16x128xf32>
    %363 = arith.mulf %340, %362 : vector<16x128xf32>
    %cst_127 = arith.constant dense<0.000000e+00> : vector<128xf32>
    %364 = vector.multi_reduction <add>, %363, %cst_127 [0] : vector<16x128xf32> to vector<128xf32>
    %365 = vector.shape_cast %364 : vector<128xf32> to vector<1x128xf32>
    %cst_128 = arith.constant dense<0.000000e+00> : vector<128xf32>
    %366 = vector.multi_reduction <add>, %340, %cst_128 [0] : vector<16x128xf32> to vector<128xf32>
    %367 = vector.shape_cast %366 : vector<128xf32> to vector<1x128xf32>
    %368 = tpu.reciprocal %367 {approx = true} : vector<1x128xf32> -> vector<1x128xf32>
    %369 = arith.mulf %365, %368 : vector<1x128xf32>
    %cst_129 = arith.constant 2.000000e+00 : f32
    %370 = vector.broadcast %cst_129 : f32 to vector<1x128xf32>
    %371 = arith.mulf %369, %370 : vector<1x128xf32>
    %cst_130 = arith.constant 1.000000e+00 : f32
    %372 = vector.broadcast %cst_130 : f32 to vector<1x128xf32>
    %373 = arith.subf %371, %372 : vector<1x128xf32>
    %374 = arith.select %345, %373, %185 : vector<1x128xi1>, vector<1x128xf32>
    %c2 = arith.constant 2 : index
    %c0_131 = arith.constant 0 : index
    %c0_132 = arith.constant 0 : index
    %375 = vector.load %arg2[%c2, %c0_131, %c0_132] : memref<4x32x3xf32, #tpu.memory_space<vmem>>, vector<1x32x3xf32>
    %376 = vector.shape_cast %375 : vector<1x32x3xf32> to vector<32x3xf32>
    %c2_133 = arith.constant 2 : index
    %c0_134 = arith.constant 0 : index
    %c0_135 = arith.constant 0 : index
    %377 = vector.load %arg3[%c2_133, %c0_134, %c0_135] : memref<4x32x1xf32, #tpu.memory_space<vmem>>, vector<1x32x1xf32>
    %378 = vector.shape_cast %377 : vector<1x32x1xf32> to vector<32x1xf32>
    %c2_136 = arith.constant 2 : index
    %c0_137 = arith.constant 0 : index
    %c0_138 = arith.constant 0 : index
    %379 = vector.load %arg4[%c2_136, %c0_137, %c0_138] : memref<4x48x32xf32, #tpu.memory_space<vmem>>, vector<1x48x32xf32>
    %380 = vector.shape_cast %379 : vector<1x48x32xf32> to vector<48x32xf32>
    %c2_139 = arith.constant 2 : index
    %c0_140 = arith.constant 0 : index
    %c0_141 = arith.constant 0 : index
    %381 = vector.load %arg5[%c2_139, %c0_140, %c0_141] : memref<4x48x1xf32, #tpu.memory_space<vmem>>, vector<1x48x1xf32>
    %382 = vector.shape_cast %381 : vector<1x48x1xf32> to vector<48x1xf32>
    %383 = vector.extract_strided_slice %376 {offsets = [0, 0], sizes = [32, 1], strides = [1, 1]} : vector<32x3xf32> to vector<32x1xf32>
    %384 = vector.broadcast %383 : vector<32x1xf32> to vector<32x128xf32>
    %385 = vector.broadcast %76 : vector<1x128xf32> to vector<32x128xf32>
    %386 = arith.mulf %384, %385 : vector<32x128xf32>
    %387 = vector.broadcast %378 : vector<32x1xf32> to vector<32x128xf32>
    %388 = arith.addf %387, %386 : vector<32x128xf32>
    %389 = vector.extract_strided_slice %376 {offsets = [0, 1], sizes = [32, 1], strides = [1, 1]} : vector<32x3xf32> to vector<32x1xf32>
    %390 = vector.broadcast %389 : vector<32x1xf32> to vector<32x128xf32>
    %391 = vector.broadcast %334 : vector<1x128xf32> to vector<32x128xf32>
    %392 = arith.mulf %390, %391 : vector<32x128xf32>
    %393 = arith.addf %388, %392 : vector<32x128xf32>
    %394 = vector.extract_strided_slice %376 {offsets = [0, 2], sizes = [32, 1], strides = [1, 1]} : vector<32x3xf32> to vector<32x1xf32>
    %395 = vector.broadcast %394 : vector<32x1xf32> to vector<32x128xf32>
    %396 = vector.broadcast %225 : vector<1x128xf32> to vector<32x128xf32>
    %397 = arith.mulf %395, %396 : vector<32x128xf32>
    %398 = arith.addf %393, %397 : vector<32x128xf32>
    %cst_142 = arith.constant 0.000000e+00 : f32
    %399 = vector.broadcast %cst_142 : f32 to vector<32x128xf32>
    %400 = arith.maximumf %398, %399 : vector<32x128xf32>
    %cst_143 = arith.constant dense<0.000000e+00> : vector<48x128xf32>
    %401 = tpu.matmul %380, %400, %cst_143 {dimension_numbers = #tpu.dot_dimension_numbers<[1], [0], [0], [1], [0, 0, 1, 1], [], []>} : vector<48x32xf32>, vector<32x128xf32>, vector<48x128xf32> -> vector<48x128xf32>
    %402 = vector.broadcast %382 : vector<48x1xf32> to vector<48x128xf32>
    %403 = arith.addf %401, %402 : vector<48x128xf32>
    %404 = vector.extract_strided_slice %403 {offsets = [0, 0], sizes = [16, 128], strides = [1, 1]} : vector<48x128xf32> to vector<16x128xf32>
    %cst_144 = arith.constant dense<0xFF800000> : vector<128xf32>
    %405 = vector.multi_reduction <maximumf>, %404, %cst_144 [0] : vector<16x128xf32> to vector<128xf32>
    %406 = vector.shape_cast %405 : vector<128xf32> to vector<1x128xf32>
    %407 = vector.broadcast %406 : vector<1x128xf32> to vector<16x128xf32>
    %408 = arith.subf %404, %407 : vector<16x128xf32>
    %409 = math.exp %408 : vector<16x128xf32>
    %cst_145 = arith.constant -1.000000e+00 : f32
    %410 = vector.broadcast %cst_145 : f32 to vector<1x128xf32>
    %411 = arith.cmpf oge, %294, %410 : vector<1x128xf32>
    %cst_146 = arith.constant 1.000000e+00 : f32
    %412 = vector.broadcast %cst_146 : f32 to vector<1x128xf32>
    %413 = arith.cmpf ole, %294, %412 : vector<1x128xf32>
    %414 = arith.andi %411, %413 : vector<1x128xi1>
    %cst_147 = arith.constant 1.000000e+00 : f32
    %415 = vector.broadcast %cst_147 : f32 to vector<1x128xf32>
    %416 = arith.addf %294, %415 : vector<1x128xf32>
    %cst_148 = arith.constant 5.000000e-01 : f32
    %417 = vector.broadcast %cst_148 : f32 to vector<1x128xf32>
    %418 = arith.mulf %416, %417 : vector<1x128xf32>
    %cst_149 = arith.constant 0.000000e+00 : f32
    %cst_150 = arith.constant 1.000000e+00 : f32
    %419 = vector.broadcast %cst_149 : f32 to vector<1x128xf32>
    %420 = arith.maximumf %419, %418 : vector<1x128xf32>
    %421 = vector.broadcast %cst_150 : f32 to vector<1x128xf32>
    %422 = arith.minimumf %421, %420 : vector<1x128xf32>
    %cst_151 = arith.constant 1.600000e+01 : f32
    %423 = vector.broadcast %cst_151 : f32 to vector<1x128xf32>
    %424 = arith.mulf %422, %423 : vector<1x128xf32>
    %425 = vector.broadcast %424 : vector<1x128xf32> to vector<16x128xf32>
    %426 = vector.broadcast %1 : vector<16x1xf32> to vector<16x128xf32>
    %427 = arith.subf %425, %426 : vector<16x128xf32>
    %cst_152 = arith.constant 0.000000e+00 : f32
    %cst_153 = arith.constant 1.000000e+00 : f32
    %428 = vector.broadcast %cst_152 : f32 to vector<16x128xf32>
    %429 = arith.maximumf %428, %427 : vector<16x128xf32>
    %430 = vector.broadcast %cst_153 : f32 to vector<16x128xf32>
    %431 = arith.minimumf %430, %429 : vector<16x128xf32>
    %432 = arith.mulf %409, %431 : vector<16x128xf32>
    %cst_154 = arith.constant dense<0.000000e+00> : vector<128xf32>
    %433 = vector.multi_reduction <add>, %432, %cst_154 [0] : vector<16x128xf32> to vector<128xf32>
    %434 = vector.shape_cast %433 : vector<128xf32> to vector<1x128xf32>
    %cst_155 = arith.constant dense<0.000000e+00> : vector<128xf32>
    %435 = vector.multi_reduction <add>, %409, %cst_155 [0] : vector<16x128xf32> to vector<128xf32>
    %436 = vector.shape_cast %435 : vector<128xf32> to vector<1x128xf32>
    %437 = tpu.reciprocal %436 {approx = true} : vector<1x128xf32> -> vector<1x128xf32>
    %438 = arith.mulf %434, %437 : vector<1x128xf32>
    %cst_156 = arith.constant 2.000000e+00 : f32
    %439 = vector.broadcast %cst_156 : f32 to vector<1x128xf32>
    %440 = arith.mulf %438, %439 : vector<1x128xf32>
    %cst_157 = arith.constant 1.000000e+00 : f32
    %441 = vector.broadcast %cst_157 : f32 to vector<1x128xf32>
    %442 = arith.subf %440, %441 : vector<1x128xf32>
    %443 = arith.select %414, %442, %294 : vector<1x128xi1>, vector<1x128xf32>
    %444 = vector.extract_strided_slice %403 {offsets = [16, 0], sizes = [16, 128], strides = [1, 1]} : vector<48x128xf32> to vector<16x128xf32>
    %cst_158 = arith.constant dense<0xFF800000> : vector<128xf32>
    %445 = vector.multi_reduction <maximumf>, %444, %cst_158 [0] : vector<16x128xf32> to vector<128xf32>
    %446 = vector.shape_cast %445 : vector<128xf32> to vector<1x128xf32>
    %447 = vector.broadcast %446 : vector<1x128xf32> to vector<16x128xf32>
    %448 = arith.subf %444, %447 : vector<16x128xf32>
    %449 = math.exp %448 : vector<16x128xf32>
    %cst_159 = arith.constant -1.000000e+00 : f32
    %450 = vector.broadcast %cst_159 : f32 to vector<1x128xf32>
    %451 = arith.cmpf oge, %374, %450 : vector<1x128xf32>
    %cst_160 = arith.constant 1.000000e+00 : f32
    %452 = vector.broadcast %cst_160 : f32 to vector<1x128xf32>
    %453 = arith.cmpf ole, %374, %452 : vector<1x128xf32>
    %454 = arith.andi %451, %453 : vector<1x128xi1>
    %cst_161 = arith.constant 1.000000e+00 : f32
    %455 = vector.broadcast %cst_161 : f32 to vector<1x128xf32>
    %456 = arith.addf %374, %455 : vector<1x128xf32>
    %cst_162 = arith.constant 5.000000e-01 : f32
    %457 = vector.broadcast %cst_162 : f32 to vector<1x128xf32>
    %458 = arith.mulf %456, %457 : vector<1x128xf32>
    %cst_163 = arith.constant 0.000000e+00 : f32
    %cst_164 = arith.constant 1.000000e+00 : f32
    %459 = vector.broadcast %cst_163 : f32 to vector<1x128xf32>
    %460 = arith.maximumf %459, %458 : vector<1x128xf32>
    %461 = vector.broadcast %cst_164 : f32 to vector<1x128xf32>
    %462 = arith.minimumf %461, %460 : vector<1x128xf32>
    %cst_165 = arith.constant 1.600000e+01 : f32
    %463 = vector.broadcast %cst_165 : f32 to vector<1x128xf32>
    %464 = arith.mulf %462, %463 : vector<1x128xf32>
    %465 = vector.broadcast %464 : vector<1x128xf32> to vector<16x128xf32>
    %466 = vector.broadcast %1 : vector<16x1xf32> to vector<16x128xf32>
    %467 = arith.subf %465, %466 : vector<16x128xf32>
    %cst_166 = arith.constant 0.000000e+00 : f32
    %cst_167 = arith.constant 1.000000e+00 : f32
    %468 = vector.broadcast %cst_166 : f32 to vector<16x128xf32>
    %469 = arith.maximumf %468, %467 : vector<16x128xf32>
    %470 = vector.broadcast %cst_167 : f32 to vector<16x128xf32>
    %471 = arith.minimumf %470, %469 : vector<16x128xf32>
    %472 = arith.mulf %449, %471 : vector<16x128xf32>
    %cst_168 = arith.constant dense<0.000000e+00> : vector<128xf32>
    %473 = vector.multi_reduction <add>, %472, %cst_168 [0] : vector<16x128xf32> to vector<128xf32>
    %474 = vector.shape_cast %473 : vector<128xf32> to vector<1x128xf32>
    %cst_169 = arith.constant dense<0.000000e+00> : vector<128xf32>
    %475 = vector.multi_reduction <add>, %449, %cst_169 [0] : vector<16x128xf32> to vector<128xf32>
    %476 = vector.shape_cast %475 : vector<128xf32> to vector<1x128xf32>
    %477 = tpu.reciprocal %476 {approx = true} : vector<1x128xf32> -> vector<1x128xf32>
    %478 = arith.mulf %474, %477 : vector<1x128xf32>
    %cst_170 = arith.constant 2.000000e+00 : f32
    %479 = vector.broadcast %cst_170 : f32 to vector<1x128xf32>
    %480 = arith.mulf %478, %479 : vector<1x128xf32>
    %cst_171 = arith.constant 1.000000e+00 : f32
    %481 = vector.broadcast %cst_171 : f32 to vector<1x128xf32>
    %482 = arith.subf %480, %481 : vector<1x128xf32>
    %483 = arith.select %454, %482, %374 : vector<1x128xi1>, vector<1x128xf32>
    %484 = vector.extract_strided_slice %403 {offsets = [32, 0], sizes = [16, 128], strides = [1, 1]} : vector<48x128xf32> to vector<16x128xf32>
    %cst_172 = arith.constant dense<0xFF800000> : vector<128xf32>
    %485 = vector.multi_reduction <maximumf>, %484, %cst_172 [0] : vector<16x128xf32> to vector<128xf32>
    %486 = vector.shape_cast %485 : vector<128xf32> to vector<1x128xf32>
    %487 = vector.broadcast %486 : vector<1x128xf32> to vector<16x128xf32>
    %488 = arith.subf %484, %487 : vector<16x128xf32>
    %489 = math.exp %488 : vector<16x128xf32>
    %cst_173 = arith.constant -1.000000e+00 : f32
    %490 = vector.broadcast %cst_173 : f32 to vector<1x128xf32>
    %491 = arith.cmpf oge, %71, %490 : vector<1x128xf32>
    %cst_174 = arith.constant 1.000000e+00 : f32
    %492 = vector.broadcast %cst_174 : f32 to vector<1x128xf32>
    %493 = arith.cmpf ole, %71, %492 : vector<1x128xf32>
    %494 = arith.andi %491, %493 : vector<1x128xi1>
    %cst_175 = arith.constant 1.000000e+00 : f32
    %495 = vector.broadcast %cst_175 : f32 to vector<1x128xf32>
    %496 = arith.addf %71, %495 : vector<1x128xf32>
    %cst_176 = arith.constant 5.000000e-01 : f32
    %497 = vector.broadcast %cst_176 : f32 to vector<1x128xf32>
    %498 = arith.mulf %496, %497 : vector<1x128xf32>
    %cst_177 = arith.constant 0.000000e+00 : f32
    %cst_178 = arith.constant 1.000000e+00 : f32
    %499 = vector.broadcast %cst_177 : f32 to vector<1x128xf32>
    %500 = arith.maximumf %499, %498 : vector<1x128xf32>
    %501 = vector.broadcast %cst_178 : f32 to vector<1x128xf32>
    %502 = arith.minimumf %501, %500 : vector<1x128xf32>
    %cst_179 = arith.constant 1.600000e+01 : f32
    %503 = vector.broadcast %cst_179 : f32 to vector<1x128xf32>
    %504 = arith.mulf %502, %503 : vector<1x128xf32>
    %505 = vector.broadcast %504 : vector<1x128xf32> to vector<16x128xf32>
    %506 = vector.broadcast %1 : vector<16x1xf32> to vector<16x128xf32>
    %507 = arith.subf %505, %506 : vector<16x128xf32>
    %cst_180 = arith.constant 0.000000e+00 : f32
    %cst_181 = arith.constant 1.000000e+00 : f32
    %508 = vector.broadcast %cst_180 : f32 to vector<16x128xf32>
    %509 = arith.maximumf %508, %507 : vector<16x128xf32>
    %510 = vector.broadcast %cst_181 : f32 to vector<16x128xf32>
    %511 = arith.minimumf %510, %509 : vector<16x128xf32>
    %512 = arith.mulf %489, %511 : vector<16x128xf32>
    %cst_182 = arith.constant dense<0.000000e+00> : vector<128xf32>
    %513 = vector.multi_reduction <add>, %512, %cst_182 [0] : vector<16x128xf32> to vector<128xf32>
    %514 = vector.shape_cast %513 : vector<128xf32> to vector<1x128xf32>
    %cst_183 = arith.constant dense<0.000000e+00> : vector<128xf32>
    %515 = vector.multi_reduction <add>, %489, %cst_183 [0] : vector<16x128xf32> to vector<128xf32>
    %516 = vector.shape_cast %515 : vector<128xf32> to vector<1x128xf32>
    %517 = tpu.reciprocal %516 {approx = true} : vector<1x128xf32> -> vector<1x128xf32>
    %518 = arith.mulf %514, %517 : vector<1x128xf32>
    %cst_184 = arith.constant 2.000000e+00 : f32
    %519 = vector.broadcast %cst_184 : f32 to vector<1x128xf32>
    %520 = arith.mulf %518, %519 : vector<1x128xf32>
    %cst_185 = arith.constant 1.000000e+00 : f32
    %521 = vector.broadcast %cst_185 : f32 to vector<1x128xf32>
    %522 = arith.subf %520, %521 : vector<1x128xf32>
    %523 = arith.select %494, %522, %71 : vector<1x128xi1>, vector<1x128xf32>
    %c3 = arith.constant 3 : index
    %c0_186 = arith.constant 0 : index
    %c0_187 = arith.constant 0 : index
    %524 = vector.load %arg2[%c3, %c0_186, %c0_187] : memref<4x32x3xf32, #tpu.memory_space<vmem>>, vector<1x32x3xf32>
    %525 = vector.shape_cast %524 : vector<1x32x3xf32> to vector<32x3xf32>
    %c3_188 = arith.constant 3 : index
    %c0_189 = arith.constant 0 : index
    %c0_190 = arith.constant 0 : index
    %526 = vector.load %arg3[%c3_188, %c0_189, %c0_190] : memref<4x32x1xf32, #tpu.memory_space<vmem>>, vector<1x32x1xf32>
    %527 = vector.shape_cast %526 : vector<1x32x1xf32> to vector<32x1xf32>
    %c3_191 = arith.constant 3 : index
    %c0_192 = arith.constant 0 : index
    %c0_193 = arith.constant 0 : index
    %528 = vector.load %arg4[%c3_191, %c0_192, %c0_193] : memref<4x48x32xf32, #tpu.memory_space<vmem>>, vector<1x48x32xf32>
    %529 = vector.shape_cast %528 : vector<1x48x32xf32> to vector<48x32xf32>
    %c3_194 = arith.constant 3 : index
    %c0_195 = arith.constant 0 : index
    %c0_196 = arith.constant 0 : index
    %530 = vector.load %arg5[%c3_194, %c0_195, %c0_196] : memref<4x48x1xf32, #tpu.memory_space<vmem>>, vector<1x48x1xf32>
    %531 = vector.shape_cast %530 : vector<1x48x1xf32> to vector<48x1xf32>
    %532 = vector.extract_strided_slice %525 {offsets = [0, 0], sizes = [32, 1], strides = [1, 1]} : vector<32x3xf32> to vector<32x1xf32>
    %533 = vector.broadcast %532 : vector<32x1xf32> to vector<32x128xf32>
    %534 = vector.broadcast %523 : vector<1x128xf32> to vector<32x128xf32>
    %535 = arith.mulf %533, %534 : vector<32x128xf32>
    %536 = vector.broadcast %527 : vector<32x1xf32> to vector<32x128xf32>
    %537 = arith.addf %536, %535 : vector<32x128xf32>
    %538 = vector.extract_strided_slice %525 {offsets = [0, 1], sizes = [32, 1], strides = [1, 1]} : vector<32x3xf32> to vector<32x1xf32>
    %539 = vector.broadcast %538 : vector<32x1xf32> to vector<32x128xf32>
    %540 = vector.broadcast %334 : vector<1x128xf32> to vector<32x128xf32>
    %541 = arith.mulf %539, %540 : vector<32x128xf32>
    %542 = arith.addf %537, %541 : vector<32x128xf32>
    %543 = vector.extract_strided_slice %525 {offsets = [0, 2], sizes = [32, 1], strides = [1, 1]} : vector<32x3xf32> to vector<32x1xf32>
    %544 = vector.broadcast %543 : vector<32x1xf32> to vector<32x128xf32>
    %545 = vector.broadcast %443 : vector<1x128xf32> to vector<32x128xf32>
    %546 = arith.mulf %544, %545 : vector<32x128xf32>
    %547 = arith.addf %542, %546 : vector<32x128xf32>
    %cst_197 = arith.constant 0.000000e+00 : f32
    %548 = vector.broadcast %cst_197 : f32 to vector<32x128xf32>
    %549 = arith.maximumf %547, %548 : vector<32x128xf32>
    %cst_198 = arith.constant dense<0.000000e+00> : vector<48x128xf32>
    %550 = tpu.matmul %529, %549, %cst_198 {dimension_numbers = #tpu.dot_dimension_numbers<[1], [0], [0], [1], [0, 0, 1, 1], [], []>} : vector<48x32xf32>, vector<32x128xf32>, vector<48x128xf32> -> vector<48x128xf32>
    %551 = vector.broadcast %531 : vector<48x1xf32> to vector<48x128xf32>
    %552 = arith.addf %550, %551 : vector<48x128xf32>
    %553 = vector.extract_strided_slice %552 {offsets = [0, 0], sizes = [16, 128], strides = [1, 1]} : vector<48x128xf32> to vector<16x128xf32>
    %cst_199 = arith.constant dense<0xFF800000> : vector<128xf32>
    %554 = vector.multi_reduction <maximumf>, %553, %cst_199 [0] : vector<16x128xf32> to vector<128xf32>
    %555 = vector.shape_cast %554 : vector<128xf32> to vector<1x128xf32>
    %556 = vector.broadcast %555 : vector<1x128xf32> to vector<16x128xf32>
    %557 = arith.subf %553, %556 : vector<16x128xf32>
    %558 = math.exp %557 : vector<16x128xf32>
    %cst_200 = arith.constant -1.000000e+00 : f32
    %559 = vector.broadcast %cst_200 : f32 to vector<1x128xf32>
    %560 = arith.cmpf oge, %76, %559 : vector<1x128xf32>
    %cst_201 = arith.constant 1.000000e+00 : f32
    %561 = vector.broadcast %cst_201 : f32 to vector<1x128xf32>
    %562 = arith.cmpf ole, %76, %561 : vector<1x128xf32>
    %563 = arith.andi %560, %562 : vector<1x128xi1>
    %cst_202 = arith.constant 1.000000e+00 : f32
    %564 = vector.broadcast %cst_202 : f32 to vector<1x128xf32>
    %565 = arith.addf %76, %564 : vector<1x128xf32>
    %cst_203 = arith.constant 5.000000e-01 : f32
    %566 = vector.broadcast %cst_203 : f32 to vector<1x128xf32>
    %567 = arith.mulf %565, %566 : vector<1x128xf32>
    %cst_204 = arith.constant 0.000000e+00 : f32
    %cst_205 = arith.constant 1.000000e+00 : f32
    %568 = vector.broadcast %cst_204 : f32 to vector<1x128xf32>
    %569 = arith.maximumf %568, %567 : vector<1x128xf32>
    %570 = vector.broadcast %cst_205 : f32 to vector<1x128xf32>
    %571 = arith.minimumf %570, %569 : vector<1x128xf32>
    %cst_206 = arith.constant 1.600000e+01 : f32
    %572 = vector.broadcast %cst_206 : f32 to vector<1x128xf32>
    %573 = arith.mulf %571, %572 : vector<1x128xf32>
    %574 = vector.broadcast %573 : vector<1x128xf32> to vector<16x128xf32>
    %575 = vector.broadcast %1 : vector<16x1xf32> to vector<16x128xf32>
    %576 = arith.subf %574, %575 : vector<16x128xf32>
    %cst_207 = arith.constant 0.000000e+00 : f32
    %cst_208 = arith.constant 1.000000e+00 : f32
    %577 = vector.broadcast %cst_207 : f32 to vector<16x128xf32>
    %578 = arith.maximumf %577, %576 : vector<16x128xf32>
    %579 = vector.broadcast %cst_208 : f32 to vector<16x128xf32>
    %580 = arith.minimumf %579, %578 : vector<16x128xf32>
    %581 = arith.mulf %558, %580 : vector<16x128xf32>
    %cst_209 = arith.constant dense<0.000000e+00> : vector<128xf32>
    %582 = vector.multi_reduction <add>, %581, %cst_209 [0] : vector<16x128xf32> to vector<128xf32>
    %583 = vector.shape_cast %582 : vector<128xf32> to vector<1x128xf32>
    %cst_210 = arith.constant dense<0.000000e+00> : vector<128xf32>
    %584 = vector.multi_reduction <add>, %558, %cst_210 [0] : vector<16x128xf32> to vector<128xf32>
    %585 = vector.shape_cast %584 : vector<128xf32> to vector<1x128xf32>
    %586 = tpu.reciprocal %585 {approx = true} : vector<1x128xf32> -> vector<1x128xf32>
    %587 = arith.mulf %583, %586 : vector<1x128xf32>
    %cst_211 = arith.constant 2.000000e+00 : f32
    %588 = vector.broadcast %cst_211 : f32 to vector<1x128xf32>
    %589 = arith.mulf %587, %588 : vector<1x128xf32>
    %cst_212 = arith.constant 1.000000e+00 : f32
    %590 = vector.broadcast %cst_212 : f32 to vector<1x128xf32>
    %591 = arith.subf %589, %590 : vector<1x128xf32>
    %592 = arith.select %563, %591, %76 : vector<1x128xi1>, vector<1x128xf32>
    %593 = vector.extract_strided_slice %552 {offsets = [16, 0], sizes = [16, 128], strides = [1, 1]} : vector<48x128xf32> to vector<16x128xf32>
    %cst_213 = arith.constant dense<0xFF800000> : vector<128xf32>
    %594 = vector.multi_reduction <maximumf>, %593, %cst_213 [0] : vector<16x128xf32> to vector<128xf32>
    %595 = vector.shape_cast %594 : vector<128xf32> to vector<1x128xf32>
    %596 = vector.broadcast %595 : vector<1x128xf32> to vector<16x128xf32>
    %597 = arith.subf %593, %596 : vector<16x128xf32>
    %598 = math.exp %597 : vector<16x128xf32>
    %cst_214 = arith.constant -1.000000e+00 : f32
    %599 = vector.broadcast %cst_214 : f32 to vector<1x128xf32>
    %600 = arith.cmpf oge, %225, %599 : vector<1x128xf32>
    %cst_215 = arith.constant 1.000000e+00 : f32
    %601 = vector.broadcast %cst_215 : f32 to vector<1x128xf32>
    %602 = arith.cmpf ole, %225, %601 : vector<1x128xf32>
    %603 = arith.andi %600, %602 : vector<1x128xi1>
    %cst_216 = arith.constant 1.000000e+00 : f32
    %604 = vector.broadcast %cst_216 : f32 to vector<1x128xf32>
    %605 = arith.addf %225, %604 : vector<1x128xf32>
    %cst_217 = arith.constant 5.000000e-01 : f32
    %606 = vector.broadcast %cst_217 : f32 to vector<1x128xf32>
    %607 = arith.mulf %605, %606 : vector<1x128xf32>
    %cst_218 = arith.constant 0.000000e+00 : f32
    %cst_219 = arith.constant 1.000000e+00 : f32
    %608 = vector.broadcast %cst_218 : f32 to vector<1x128xf32>
    %609 = arith.maximumf %608, %607 : vector<1x128xf32>
    %610 = vector.broadcast %cst_219 : f32 to vector<1x128xf32>
    %611 = arith.minimumf %610, %609 : vector<1x128xf32>
    %cst_220 = arith.constant 1.600000e+01 : f32
    %612 = vector.broadcast %cst_220 : f32 to vector<1x128xf32>
    %613 = arith.mulf %611, %612 : vector<1x128xf32>
    %614 = vector.broadcast %613 : vector<1x128xf32> to vector<16x128xf32>
    %615 = vector.broadcast %1 : vector<16x1xf32> to vector<16x128xf32>
    %616 = arith.subf %614, %615 : vector<16x128xf32>
    %cst_221 = arith.constant 0.000000e+00 : f32
    %cst_222 = arith.constant 1.000000e+00 : f32
    %617 = vector.broadcast %cst_221 : f32 to vector<16x128xf32>
    %618 = arith.maximumf %617, %616 : vector<16x128xf32>
    %619 = vector.broadcast %cst_222 : f32 to vector<16x128xf32>
    %620 = arith.minimumf %619, %618 : vector<16x128xf32>
    %621 = arith.mulf %598, %620 : vector<16x128xf32>
    %cst_223 = arith.constant dense<0.000000e+00> : vector<128xf32>
    %622 = vector.multi_reduction <add>, %621, %cst_223 [0] : vector<16x128xf32> to vector<128xf32>
    %623 = vector.shape_cast %622 : vector<128xf32> to vector<1x128xf32>
    %cst_224 = arith.constant dense<0.000000e+00> : vector<128xf32>
    %624 = vector.multi_reduction <add>, %598, %cst_224 [0] : vector<16x128xf32> to vector<128xf32>
    %625 = vector.shape_cast %624 : vector<128xf32> to vector<1x128xf32>
    %626 = tpu.reciprocal %625 {approx = true} : vector<1x128xf32> -> vector<1x128xf32>
    %627 = arith.mulf %623, %626 : vector<1x128xf32>
    %cst_225 = arith.constant 2.000000e+00 : f32
    %628 = vector.broadcast %cst_225 : f32 to vector<1x128xf32>
    %629 = arith.mulf %627, %628 : vector<1x128xf32>
    %cst_226 = arith.constant 1.000000e+00 : f32
    %630 = vector.broadcast %cst_226 : f32 to vector<1x128xf32>
    %631 = arith.subf %629, %630 : vector<1x128xf32>
    %632 = arith.select %603, %631, %225 : vector<1x128xi1>, vector<1x128xf32>
    %633 = vector.extract_strided_slice %552 {offsets = [32, 0], sizes = [16, 128], strides = [1, 1]} : vector<48x128xf32> to vector<16x128xf32>
    %cst_227 = arith.constant dense<0xFF800000> : vector<128xf32>
    %634 = vector.multi_reduction <maximumf>, %633, %cst_227 [0] : vector<16x128xf32> to vector<128xf32>
    %635 = vector.shape_cast %634 : vector<128xf32> to vector<1x128xf32>
    %636 = vector.broadcast %635 : vector<1x128xf32> to vector<16x128xf32>
    %637 = arith.subf %633, %636 : vector<16x128xf32>
    %638 = math.exp %637 : vector<16x128xf32>
    %cst_228 = arith.constant -1.000000e+00 : f32
    %639 = vector.broadcast %cst_228 : f32 to vector<1x128xf32>
    %640 = arith.cmpf oge, %483, %639 : vector<1x128xf32>
    %cst_229 = arith.constant 1.000000e+00 : f32
    %641 = vector.broadcast %cst_229 : f32 to vector<1x128xf32>
    %642 = arith.cmpf ole, %483, %641 : vector<1x128xf32>
    %643 = arith.andi %640, %642 : vector<1x128xi1>
    %cst_230 = arith.constant 1.000000e+00 : f32
    %644 = vector.broadcast %cst_230 : f32 to vector<1x128xf32>
    %645 = arith.addf %483, %644 : vector<1x128xf32>
    %cst_231 = arith.constant 5.000000e-01 : f32
    %646 = vector.broadcast %cst_231 : f32 to vector<1x128xf32>
    %647 = arith.mulf %645, %646 : vector<1x128xf32>
    %cst_232 = arith.constant 0.000000e+00 : f32
    %cst_233 = arith.constant 1.000000e+00 : f32
    %648 = vector.broadcast %cst_232 : f32 to vector<1x128xf32>
    %649 = arith.maximumf %648, %647 : vector<1x128xf32>
    %650 = vector.broadcast %cst_233 : f32 to vector<1x128xf32>
    %651 = arith.minimumf %650, %649 : vector<1x128xf32>
    %cst_234 = arith.constant 1.600000e+01 : f32
    %652 = vector.broadcast %cst_234 : f32 to vector<1x128xf32>
    %653 = arith.mulf %651, %652 : vector<1x128xf32>
    %654 = vector.broadcast %653 : vector<1x128xf32> to vector<16x128xf32>
    %655 = vector.broadcast %1 : vector<16x1xf32> to vector<16x128xf32>
    %656 = arith.subf %654, %655 : vector<16x128xf32>
    %cst_235 = arith.constant 0.000000e+00 : f32
    %cst_236 = arith.constant 1.000000e+00 : f32
    %657 = vector.broadcast %cst_235 : f32 to vector<16x128xf32>
    %658 = arith.maximumf %657, %656 : vector<16x128xf32>
    %659 = vector.broadcast %cst_236 : f32 to vector<16x128xf32>
    %660 = arith.minimumf %659, %658 : vector<16x128xf32>
    %661 = arith.mulf %638, %660 : vector<16x128xf32>
    %cst_237 = arith.constant dense<0.000000e+00> : vector<128xf32>
    %662 = vector.multi_reduction <add>, %661, %cst_237 [0] : vector<16x128xf32> to vector<128xf32>
    %663 = vector.shape_cast %662 : vector<128xf32> to vector<1x128xf32>
    %cst_238 = arith.constant dense<0.000000e+00> : vector<128xf32>
    %664 = vector.multi_reduction <add>, %638, %cst_238 [0] : vector<16x128xf32> to vector<128xf32>
    %665 = vector.shape_cast %664 : vector<128xf32> to vector<1x128xf32>
    %666 = tpu.reciprocal %665 {approx = true} : vector<1x128xf32> -> vector<1x128xf32>
    %667 = arith.mulf %663, %666 : vector<1x128xf32>
    %cst_239 = arith.constant 2.000000e+00 : f32
    %668 = vector.broadcast %cst_239 : f32 to vector<1x128xf32>
    %669 = arith.mulf %667, %668 : vector<1x128xf32>
    %cst_240 = arith.constant 1.000000e+00 : f32
    %670 = vector.broadcast %cst_240 : f32 to vector<1x128xf32>
    %671 = arith.subf %669, %670 : vector<1x128xf32>
    %672 = arith.select %643, %671, %483 : vector<1x128xi1>, vector<1x128xf32>
    %673 = tpu.concatenate %592, %632, %672, %523, %334, %443 in 0 : vector<1x128xf32>, vector<1x128xf32>, vector<1x128xf32>, vector<1x128xf32>, vector<1x128xf32>, vector<1x128xf32> -> vector<6x128xf32>
    %c0_241 = arith.constant 0 : index
    %c0_242 = arith.constant 0 : index
    %674 = vector.load %arg6[%c0_241, %c0_242] : memref<6x128xf32, #tpu.memory_space<vmem>>, vector<6x128xf32>
    tpu.vector_store %arg6[%c0_241, %c0_242], %673 {strides = array<i32>} : memref<6x128xf32, #tpu.memory_space<vmem>>, vector<6x128xf32>,
    return
  }
  func.func @transform_0(%arg0: i32) -> (i32, i32) {
    %c0_i32 = arith.constant 0 : i32
    %c0_i32_0 = arith.constant 0 : i32
    return %c0_i32, %arg0 : i32, i32
  }
  func.func @transform_1(%arg0: i32) -> (i32, i32, i32) {
    %c0_i32 = arith.constant 0 : i32
    %c0_i32_0 = arith.constant 0 : i32
    %c0_i32_1 = arith.constant 0 : i32
    %c0_i32_2 = arith.constant 0 : i32
    return %c0_i32, %c0_i32_0, %c0_i32_1 : i32, i32, i32
  }
  func.func @transform_2(%arg0: i32) -> (i32, i32, i32) {
    %c0_i32 = arith.constant 0 : i32
    %c0_i32_0 = arith.constant 0 : i32
    %c0_i32_1 = arith.constant 0 : i32
    %c0_i32_2 = arith.constant 0 : i32
    return %c0_i32, %c0_i32_0, %c0_i32_1 : i32, i32, i32
  }
  func.func @transform_3(%arg0: i32) -> (i32, i32, i32) {
    %c0_i32 = arith.constant 0 : i32
    %c0_i32_0 = arith.constant 0 : i32
    %c0_i32_1 = arith.constant 0 : i32
    %c0_i32_2 = arith.constant 0 : i32
    return %c0_i32, %c0_i32_0, %c0_i32_1 : i32, i32, i32
  }
  func.func @transform_4(%arg0: i32) -> (i32, i32, i32) {
    %c0_i32 = arith.constant 0 : i32
    %c0_i32_0 = arith.constant 0 : i32
    %c0_i32_1 = arith.constant 0 : i32
    %c0_i32_2 = arith.constant 0 : i32
    return %c0_i32, %c0_i32_0, %c0_i32_1 : i32, i32, i32
  }
  func.func @transform_5(%arg0: i32) -> (i32, i32) {
    %c0_i32 = arith.constant 0 : i32
    %c0_i32_0 = arith.constant 0 : i32
    return %c0_i32, %arg0 : i32, i32
  }
}

</mosaic_0001>

<llo_original>
// kernel: forward.1
$region0: #{forward.1}
  #allocation0 [shape = 'u32[]', space=smem, size = 0x4, offset = 0x4, fixed_abs, tag = 'smem constant byte address 0x4 - core index']
  #allocation1 [shape = 'u32[72,128]{1,0:T(1,128)}', space=vmem, size = 0x9000, scoped, tag = 'internal scratch']
  %s0 = inlined_call_operand.vmem [shape: f32[6,128], index: 0, kind: input, shape index: {}]
  %s1 = inlined_call_operand.vmem [shape: f32[4,32,3], index: 1, kind: input, shape index: {}]
  %s2 = inlined_call_operand.vmem [shape: f32[4,32,1], index: 2, kind: input, shape index: {}]
  %s3 = inlined_call_operand.vmem [shape: f32[4,48,32], index: 3, kind: input, shape index: {}]
  %s4 = inlined_call_operand.vmem [shape: f32[4,48,1], index: 4, kind: input, shape index: {}]
  %s5 = inlined_call_operand.vmem [shape: f32[6,128], index: 5, kind: output, shape index: {}]
  %s6 = sld [smem:[#allocation0]]
  $region30: #{forward.1} parent=0
    _
  %s8 = ssub.s32 1, %s6
  %s9 = scalar_select 0, %s8, %s6
  // Predicated region
  $region2: #{forward.1} parent=0 // pred_check
    _
  $region3: #{forward.1} parent=0 // pred_check_branch
    %11 = sbr.rel (0) target = $region5
  $region4: #{forward.1} parent=0 // pred_region
    _
  $region5: #{forward.1} parent=0 // pred_fallthru
    _
  // Predicated region
  $region6: #{forward.1} parent=0 // pred_check
    _
  $region7: #{forward.1} parent=0 // pred_check_branch
    %13 = sbr.rel (0) target = $region9
  $region8: #{forward.1} parent=0 // pred_region
    _
  $region9: #{forward.1} parent=0 // pred_fallthru
    _
  // Predicated region
  $region10: #{forward.1} parent=0 // pred_check
    _
  $region11: #{forward.1} parent=0 // pred_check_branch
    %15 = sbr.rel (0) target = $region13
  $region12: #{forward.1} parent=0 // pred_region
    _
  $region13: #{forward.1} parent=0 // pred_fallthru
    _
  // Predicated region
  $region14: #{forward.1} parent=0 // pred_check
    _
  $region15: #{forward.1} parent=0 // pred_check_branch
    %17 = sbr.rel (0) target = $region17
  $region16: #{forward.1} parent=0 // pred_region
    _
  $region17: #{forward.1} parent=0 // pred_fallthru
    _
  // Predicated region
  $region18: #{forward.1} parent=0 // pred_check
    _
  $region19: #{forward.1} parent=0 // pred_check_branch
    %19 = sbr.rel (0) target = $region21
  $region20: #{forward.1} parent=0 // pred_region
    _
  $region21: #{forward.1} parent=0 // pred_fallthru
    _
  %v20 = vlaneseq
  %v21 = vshrl.u32 %v20, 7
  %v22 = vadd.s32 %v21, 8
  %v23 = vcvt.s32.f32 %v21
  %v24 = vcvt.s32.f32 %v22
  %v25 = vld [vmem:[%s0] sm:$0x3f]
  %v26 = vmax.f32 %v25, -1.0
  %v27 = vmin.f32 %v26, 1.0
  %v28 = vmul.f32 %v25, 0.31830987
  %v29 = vmul.f32 %v28, %v28
  %v31 = vrot.slane %v29, 1
  %v33 = vadd.f32 %v29, %v31
  %v34 = vrot.slane %v29, 2
  %v36 = vadd.f32 %v33, %v34
  %vm37 = vcmp.lt.f32.partialorder %v36, 1.0
  %v38 = vsub.f32 1.0, %v36
  %v39 = vsel %vm37, %v38, 1.0
  %v40 = vrsqrt.pop %v39
  %v41 = vmul.f32 %v40, %v39
  %v42 = vmul.f32 %v41, %v40
  %v43 = vmul.f32 0.5, %v42
  %v44 = vsub.f32 1.5, %v43
  %v45 = vmul.f32 %v40, %v44
  %vm46 = vweird.f32 %v39
  %vm47 = vweird.f32 %v40
  %vm48 = vmor %vm46, %vm47
  %v49 = vsel %vm48, %v40, %v45
  %v50 = vperm.slane %v49, 3
  %v51 = vmul.f32 %v28, %v50
  %v52 = vand.u32 2147483647, %v51
  %vm53 = vcmp.gt.f32.partialorder %v52, 1.0
  %v54 = vmax.f32 %v52, 1.0
  %v55 = vrcp.pop %v54
  %v56 = vmul.f32 %v54, %v55
  %v57 = vsub.f32 1.0, %v56
  %v58 = vmul.f32 %v55, %v57
  %v59 = vadd.f32 %v55, %v58
  %vm60 = vweird.f32 %v54
  %vm61 = vweird.f32 %v55
  %vm62 = vmor %vm60, %vm61
  %v63 = vsel %vm62, %v55, %v59
  %v64 = vand.u32 2147483647, %v54
  %vm65 = vcmp.eq.f32.partialorder %v64, 8.507059e+37
  %v66 = vand.u32 %v54, 2147483648
  %v67 = vor.u32 1.1754944e-38, %v66
  %v68 = vsel %vm65, %v67, %v63
  %v69 = vmul.f32 1.0, %v68
  %v70 = vsel %vm53, %v69, %v52
  %v71 = vmul.f32 %v70, %v70
  %v72 = vmul.f32 %v71, -0.0117212
  %v73 = vadd.f32 %v72, 0.05265332
  %v74 = vmul.f32 %v73, %v71
  %v75 = vsub.f32 %v74, 0.11643287
  %v76 = vmul.f32 %v75, %v71
  %v77 = vadd.f32 %v76, 0.19354346
  %v78 = vmul.f32 %v77, %v71
  %v79 = vsub.f32 %v78, 0.33262348
  %v80 = vmul.f32 %v79, %v71
  %v81 = vadd.f32 %v80, 0.99997723
  %v82 = vmul.f32 %v81, %v70
  %v83 = vsub.f32 1.5707964, %v82
  %v84 = vsel %vm53, %v83, %v82
  %vm85 = vcmp.lt.f32.partialorder %v51, 0.0
  %v86 = vsub.f32 0.0, %v84
  %v87 = vsel %vm85, %v86, %v84
  %v88 = vmul.f32 %v87, 0.63661975
  %v89 = vsel %vm37, 1, 0
  %v90 = vperm.slane %v89, 3
  %vm91 = vcmp.eq.s32.totalorder %v90, 1
  %v92 = vsel %vm91, %v88, 0.0
  %v93 = vld [vmem:[%s1] sm:$0xff]
  %v94 = vld [vmem:[%s1 + $0x8] sm:$0xff]
  %v95 = vld [vmem:[%s1 + $0x10] sm:$0xff]
  %v96 = vld [vmem:[%s1 + $0x18] sm:$0xff]
  %v97 = vld [vmem:[%s2] sm:$0xff]
  %v98 = vld [vmem:[%s2 + $0x8] sm:$0xff]
  %v99 = vld [vmem:[%s2 + $0x10] sm:$0xff]
  %v100 = vld [vmem:[%s2 + $0x18] sm:$0xff]
  %v101 = vld [vmem:[%s3] sm:$0xff]
  %v102 = vld [vmem:[%s3 + $0x8] sm:$0xff]
  %v103 = vld [vmem:[%s3 + $0x10] sm:$0xff]
  %v104 = vld [vmem:[%s3 + $0x18] sm:$0xff]
  %v105 = vld [vmem:[%s3 + $0x20] sm:$0xff]
  %v106 = vld [vmem:[%s3 + $0x28] sm:$0xff]
  %v107 = vld [vmem:[%s4] sm:$0xff]
  %v108 = vld [vmem:[%s4 + $0x8] sm:$0xff]
  %v109 = vld [vmem:[%s4 + $0x10] sm:$0xff]
  %v110 = vld [vmem:[%s4 + $0x18] sm:$0xff]
  %v111 = vld [vmem:[%s4 + $0x20] sm:$0xff]
  %v112 = vld [vmem:[%s4 + $0x28] sm:$0xff]
  %114 = vset.pattern.permute.xlu0 0
  %115 = vperm.xlu0 %114, %v93
  %v116 = vpop.permute.xlu0 %115
  %119 = vset.pattern.permute.xlu0 0
  %120 = vperm.xlu0 %119, %v94
  %v121 = vpop.permute.xlu0 %120
  %124 = vset.pattern.permute.xlu0 0
  %125 = vperm.xlu0 %124, %v95
  %v126 = vpop.permute.xlu0 %125
  %129 = vset.pattern.permute.xlu0 0
  %130 = vperm.xlu0 %129, %v96
  %v131 = vpop.permute.xlu0 %130
  %v133 = vperm.slane %v92, 5
  %v134 = vmul.f32 %v116, %v133
  %v135 = vmul.f32 %v121, %v133
  %v136 = vmul.f32 %v126, %v133
  %v137 = vmul.f32 %v131, %v133
  %139 = vset.pattern.permute.xlu0 0
  %140 = vperm.xlu0 %139, %v97
  %v141 = vpop.permute.xlu0 %140
  %144 = vset.pattern.permute.xlu0 0
  %145 = vperm.xlu0 %144, %v98
  %v146 = vpop.permute.xlu0 %145
  %149 = vset.pattern.permute.xlu0 0
  %150 = vperm.xlu0 %149, %v99
  %v151 = vpop.permute.xlu0 %150
  %154 = vset.pattern.permute.xlu0 0
  %155 = vperm.xlu0 %154, %v100
  %v156 = vpop.permute.xlu0 %155
  %v158 = vadd.f32 %v141, %v134
  %v159 = vadd.f32 %v146, %v135
  %v160 = vadd.f32 %v151, %v136
  %v161 = vadd.f32 %v156, %v137
  %162 = vset.pattern.permute.xlu0 1
  %163 = vperm.xlu0 %162, %v93
  %v164 = vpop.permute.xlu0 %163
  %166 = vset.pattern.permute.xlu0 1
  %167 = vperm.xlu0 %166, %v94
  %v168 = vpop.permute.xlu0 %167
  %170 = vset.pattern.permute.xlu0 1
  %171 = vperm.xlu0 %170, %v95
  %v172 = vpop.permute.xlu0 %171
  %174 = vset.pattern.permute.xlu0 1
  %175 = vperm.xlu0 %174, %v96
  %v176 = vpop.permute.xlu0 %175
  %v178 = vperm.slane %v27, 0
  %v179 = vmul.f32 %v164, %v178
  %v180 = vmul.f32 %v168, %v178
  %v181 = vmul.f32 %v172, %v178
  %v182 = vmul.f32 %v176, %v178
  %v183 = vadd.f32 %v158, %v179
  %v184 = vadd.f32 %v159, %v180
  %v185 = vadd.f32 %v160, %v181
  %v186 = vadd.f32 %v161, %v182
  %187 = vset.pattern.permute.xlu0 2
  %188 = vperm.xlu0 %187, %v93
  %v189 = vpop.permute.xlu0 %188
  %191 = vset.pattern.permute.xlu0 2
  %192 = vperm.xlu0 %191, %v94
  %v193 = vpop.permute.xlu0 %192
  %195 = vset.pattern.permute.xlu0 2
  %196 = vperm.xlu0 %195, %v95
  %v197 = vpop.permute.xlu0 %196
  %199 = vset.pattern.permute.xlu0 2
  %200 = vperm.xlu0 %199, %v96
  %v201 = vpop.permute.xlu0 %200
  %v203 = vperm.slane %v27, 1
  %v204 = vmul.f32 %v189, %v203
  %v205 = vmul.f32 %v193, %v203
  %v206 = vmul.f32 %v197, %v203
  %v207 = vmul.f32 %v201, %v203
  %v208 = vadd.f32 %v183, %v204
  %v209 = vadd.f32 %v184, %v205
  %v210 = vadd.f32 %v185, %v206
  %v211 = vadd.f32 %v186, %v207
  %v212 = vmax.f32 %v208, 0.0
  %v213 = vmax.f32 %v209, 0.0
  %v214 = vmax.f32 %v210, 0.0
  %v215 = vmax.f32 %v211, 0.0
  %217 = vset.pattern.permute.xlu0 0
  %218 = vperm.xlu0 %217, %v107
  %v219 = vpop.permute.xlu0 %218
  %222 = vset.pattern.permute.xlu0 0
  %223 = vperm.xlu0 %222, %v108
  %v224 = vpop.permute.xlu0 %223
  %227 = vset.pattern.permute.xlu0 0
  %228 = vperm.xlu0 %227, %v109
  %v229 = vpop.permute.xlu0 %228
  %232 = vset.pattern.permute.xlu0 0
  %233 = vperm.xlu0 %232, %v110
  %v234 = vpop.permute.xlu0 %233
  %237 = vset.pattern.permute.xlu0 0
  %238 = vperm.xlu0 %237, %v111
  %v239 = vpop.permute.xlu0 %238
  %242 = vset.pattern.permute.xlu0 0
  %243 = vperm.xlu0 %242, %v112
  %v244 = vpop.permute.xlu0 %243
  %vm246 = vcmask 261120
  %v248 = vsel %vm246, %v101, 0
  %v251 = vsel %vm246, %v102, 0
  %v254 = vsel %vm246, %v103, 0
  %v257 = vsel %vm246, %v104, 0
  %v260 = vsel %vm246, %v105, 0
  %v263 = vsel %vm246, %v106, 0
  %265 = vmatpush.msra.mxu0 0.0
  %266 = vmatpush.msra.mxu0 0.0
  %267 = vmatpush.msra.mxu0 0.0
  %268 = vmatpush.msra.mxu0 0.0
  %269 = vmatpush.msra.mxu0 0.0
  %270 = vmatpush.msra.mxu0 0.0
  %271 = vmatpush.msra.mxu0 0.0
  %272 = vmatpush.msra.mxu0 0.0
  %273 = vmatpush.msra.mxu0 0.0
  %274 = vmatpush.msra.mxu0 0.0
  %275 = vmatpush.msra.mxu0 0.0
  %276 = vmatpush.msra.mxu0 0.0
  %277 = vmatpush.msra.mxu0 %v215
  %278 = vmatpush.msra.mxu0 %v214
  %279 = vmatpush.msra.mxu0 %v213
  %280 = vmatpush.msra.mxu0 %v212
  %281 = vmatmul.f32.gmra.mxu0 %v248
  %v282 = vpop.f32.mrf.mxu0
  %v283 = vadd.f32 %v219, %v282
  %284 = vmatmul.f32.gmra.mxu0 %v251
  %v285 = vpop.f32.mrf.mxu0
  %v286 = vadd.f32 %v224, %v285
  %287 = vmatmul.f32.gmra.mxu0 %v254
  %v288 = vpop.f32.mrf.mxu0
  %v289 = vadd.f32 %v229, %v288
  %290 = vmatmul.f32.gmra.mxu0 %v257
  %v291 = vpop.f32.mrf.mxu0
  %v292 = vadd.f32 %v234, %v291
  %293 = vmatmul.f32.gmra.mxu0 %v260
  %v294 = vpop.f32.mrf.mxu0
  %v295 = vadd.f32 %v239, %v294
  %296 = vmatmul.f32.gmra.mxu0 %v263
  %v297 = vpop.f32.mrf.mxu0
  %v298 = vadd.f32 %v244, %v297
  %299 = vdwg.mxu0
  %v300 = vmax.f32 %v283, %v286
  %v301 = vrot.slane %v300, 4
  %v302 = vmax.f32 %v300, %v301
  %v303 = vrot.slane %v302, 2
  %v304 = vmax.f32 %v302, %v303
  %v305 = vrot.slane %v304, 1
  %v306 = vmax.f32 %v304, %v305
  %v307 = vsub.f32 %v283, %v306
  %v308 = vsub.f32 %v286, %v306
  %v309 = vmul.f32 %v307, 1.442695
  %v310 = vpow.pop %v309
  %v311 = vmul.f32 %v308, 1.442695
  %v312 = vpow.pop %v311
  %vm313 = vcmp.ge.f32.partialorder %v27, -1.0
  %vm314 = vcmp.le.f32.partialorder %v27, 1.0
  %vm315 = vmand %vm313, %vm314
  %v316 = vadd.f32 %v27, 1.0
  %v317 = vmul.f32 %v316, 0.5
  %v318 = vmax.f32 %v317, 0.0
  %v319 = vmin.f32 %v318, 1.0
  %v320 = vmul.f32 %v319, 16.0
  %v321 = vperm.slane %v320, 2
  %v322 = vsub.f32 %v321, %v23
  %v323 = vsub.f32 %v321, %v24
  %v324 = vmax.f32 %v322, 0.0
  %v325 = vmax.f32 %v323, 0.0
  %v326 = vmin.f32 %v324, 1.0
  %v327 = vmin.f32 %v325, 1.0
  %v328 = vmul.f32 %v310, %v326
  %v329 = vmul.f32 %v312, %v327
  %v330 = vadd.f32 %v328, %v329
  %v331 = vrot.slane %v330, 4
  %v332 = vadd.f32 %v330, %v331
  %v333 = vrot.slane %v332, 2
  %v334 = vadd.f32 %v332, %v333
  %v335 = vrot.slane %v334, 1
  %v336 = vadd.f32 %v334, %v335
  %v337 = vadd.f32 %v310, %v312
  %v338 = vrot.slane %v337, 4
  %v339 = vadd.f32 %v337, %v338
  %v340 = vrot.slane %v339, 2
  %v341 = vadd.f32 %v339, %v340
  %v342 = vrot.slane %v341, 1
  %v343 = vadd.f32 %v341, %v342
  %v344 = vrcp.pop %v343
  %v345 = vmul.f32 %v336, %v344
  %v346 = vmul.f32 %v345, 2.0
  %v347 = vsub.f32 %v346, 1.0
  %v348 = vsel %vm315, %v347, %v27
  %v349 = vmax.f32 %v289, %v292
  %v350 = vrot.slane %v349, 4
  %v351 = vmax.f32 %v349, %v350
  %v352 = vrot.slane %v351, 2
  %v353 = vmax.f32 %v351, %v352
  %v354 = vrot.slane %v353, 1
  %v355 = vmax.f32 %v353, %v354
  %v356 = vsub.f32 %v289, %v355
  %v357 = vsub.f32 %v292, %v355
  %v358 = vmul.f32 %v356, 1.442695
  %v359 = vpow.pop %v358
  %v360 = vmul.f32 %v357, 1.442695
  %v361 = vpow.pop %v360
  %vm362 = vcmp.ge.f32.partialorder %v92, -1.0
  %vm363 = vcmp.le.f32.partialorder %v92, 1.0
  %vm364 = vmand %vm362, %vm363
  %v365 = vadd.f32 %v92, 1.0
  %v366 = vmul.f32 %v365, 0.5
  %v367 = vmax.f32 %v366, 0.0
  %v368 = vmin.f32 %v367, 1.0
  %v369 = vmul.f32 %v368, 16.0
  %v370 = vperm.slane %v369, 3
  %v371 = vsub.f32 %v370, %v23
  %v372 = vsub.f32 %v370, %v24
  %v373 = vmax.f32 %v371, 0.0
  %v374 = vmax.f32 %v372, 0.0
  %v375 = vmin.f32 %v373, 1.0
  %v376 = vmin.f32 %v374, 1.0
  %v377 = vmul.f32 %v359, %v375
  %v378 = vmul.f32 %v361, %v376
  %v379 = vadd.f32 %v377, %v378
  %v380 = vrot.slane %v379, 4
  %v381 = vadd.f32 %v379, %v380
  %v382 = vrot.slane %v381, 2
  %v383 = vadd.f32 %v381, %v382
  %v384 = vrot.slane %v383, 1
  %v385 = vadd.f32 %v383, %v384
  %v386 = vadd.f32 %v359, %v361
  %v387 = vrot.slane %v386, 4
  %v388 = vadd.f32 %v386, %v387
  %v389 = vrot.slane %v388, 2
  %v390 = vadd.f32 %v388, %v389
  %v391 = vrot.slane %v390, 1
  %v392 = vadd.f32 %v390, %v391
  %v393 = vrcp.pop %v392
  %v394 = vmul.f32 %v385, %v393
  %v395 = vmul.f32 %v394, 2.0
  %v396 = vsub.f32 %v395, 1.0
  %v397 = vsel %vm364, %v396, %v92
  %v398 = vmax.f32 %v295, %v298
  %v399 = vrot.slane %v398, 4
  %v400 = vmax.f32 %v398, %v399
  %v401 = vrot.slane %v400, 2
  %v402 = vmax.f32 %v400, %v401
  %v403 = vrot.slane %v402, 1
  %v404 = vmax.f32 %v402, %v403
  %v405 = vsub.f32 %v295, %v404
  %v406 = vsub.f32 %v298, %v404
  %v407 = vmul.f32 %v405, 1.442695
  %v408 = vpow.pop %v407
  %v409 = vmul.f32 %v406, 1.442695
  %v410 = vpow.pop %v409
  %v411 = vperm.slane %v369, 4
  %v412 = vsub.f32 %v411, %v23
  %v413 = vsub.f32 %v411, %v24
  %v414 = vmax.f32 %v412, 0.0
  %v415 = vmax.f32 %v413, 0.0
  %v416 = vmin.f32 %v414, 1.0
  %v417 = vmin.f32 %v415, 1.0
  %v418 = vmul.f32 %v408, %v416
  %v419 = vmul.f32 %v410, %v417
  %v420 = vadd.f32 %v418, %v419
  %v421 = vrot.slane %v420, 4
  %v422 = vadd.f32 %v420, %v421
  %v423 = vrot.slane %v422, 2
  %v424 = vadd.f32 %v422, %v423
  %v425 = vrot.slane %v424, 1
  %v426 = vadd.f32 %v424, %v425
  %v427 = vadd.f32 %v408, %v410
  %v428 = vrot.slane %v427, 4
  %v429 = vadd.f32 %v427, %v428
  %v430 = vrot.slane %v429, 2
  %v431 = vadd.f32 %v429, %v430
  %v432 = vrot.slane %v431, 1
  %v433 = vadd.f32 %v431, %v432
  %v434 = vrcp.pop %v433
  %v435 = vmul.f32 %v426, %v434
  %v436 = vmul.f32 %v435, 2.0
  %v437 = vsub.f32 %v436, 1.0
  %v438 = vsel %vm364, %v437, %v92
  %s439 = scalar_lea.vmem %s1, 32
  %v440 = vld [vmem:[%s439] sm:$0xff]
  %v441 = vld [vmem:[%s439 + $0x8] sm:$0xff]
  %v442 = vld [vmem:[%s439 + $0x10] sm:$0xff]
  %v443 = vld [vmem:[%s439 + $0x18] sm:$0xff]
  %s444 = scalar_lea.vmem %s2, 32
  %v445 = vld [vmem:[%s444] sm:$0xff]
  %v446 = vld [vmem:[%s444 + $0x8] sm:$0xff]
  %v447 = vld [vmem:[%s444 + $0x10] sm:$0xff]
  %v448 = vld [vmem:[%s444 + $0x18] sm:$0xff]
  %s449 = scalar_lea.vmem %s3, 48
  %v450 = vld [vmem:[%s449] sm:$0xff]
  %v451 = vld [vmem:[%s449 + $0x8] sm:$0xff]
  %v452 = vld [vmem:[%s449 + $0x10] sm:$0xff]
  %v453 = vld [vmem:[%s449 + $0x18] sm:$0xff]
  %v454 = vld [vmem:[%s449 + $0x20] sm:$0xff]
  %v455 = vld [vmem:[%s449 + $0x28] sm:$0xff]
  %s456 = scalar_lea.vmem %s4, 48
  %v457 = vld [vmem:[%s456] sm:$0xff]
  %v458 = vld [vmem:[%s456 + $0x8] sm:$0xff]
  %v459 = vld [vmem:[%s456 + $0x10] sm:$0xff]
  %v460 = vld [vmem:[%s456 + $0x18] sm:$0xff]
  %v461 = vld [vmem:[%s456 + $0x20] sm:$0xff]
  %v462 = vld [vmem:[%s456 + $0x28] sm:$0xff]
  %464 = vset.pattern.permute.xlu0 0
  %465 = vperm.xlu0 %464, %v440
  %v466 = vpop.permute.xlu0 %465
  %469 = vset.pattern.permute.xlu0 0
  %470 = vperm.xlu0 %469, %v441
  %v471 = vpop.permute.xlu0 %470
  %474 = vset.pattern.permute.xlu0 0
  %475 = vperm.xlu0 %474, %v442
  %v476 = vpop.permute.xlu0 %475
  %479 = vset.pattern.permute.xlu0 0
  %480 = vperm.xlu0 %479, %v443
  %v481 = vpop.permute.xlu0 %480
  %v483 = vmul.f32 %v466, %v178
  %v484 = vmul.f32 %v471, %v178
  %v485 = vmul.f32 %v476, %v178
  %v486 = vmul.f32 %v481, %v178
  %488 = vset.pattern.permute.xlu0 0
  %489 = vperm.xlu0 %488, %v445
  %v490 = vpop.permute.xlu0 %489
  %493 = vset.pattern.permute.xlu0 0
  %494 = vperm.xlu0 %493, %v446
  %v495 = vpop.permute.xlu0 %494
  %498 = vset.pattern.permute.xlu0 0
  %499 = vperm.xlu0 %498, %v447
  %v500 = vpop.permute.xlu0 %499
  %503 = vset.pattern.permute.xlu0 0
  %504 = vperm.xlu0 %503, %v448
  %v505 = vpop.permute.xlu0 %504
  %v507 = vadd.f32 %v490, %v483
  %v508 = vadd.f32 %v495, %v484
  %v509 = vadd.f32 %v500, %v485
  %v510 = vadd.f32 %v505, %v486
  %511 = vset.pattern.permute.xlu0 1
  %512 = vperm.xlu0 %511, %v440
  %v513 = vpop.permute.xlu0 %512
  %515 = vset.pattern.permute.xlu0 1
  %516 = vperm.xlu0 %515, %v441
  %v517 = vpop.permute.xlu0 %516
  %519 = vset.pattern.permute.xlu0 1
  %520 = vperm.xlu0 %519, %v442
  %v521 = vpop.permute.xlu0 %520
  %523 = vset.pattern.permute.xlu0 1
  %524 = vperm.xlu0 %523, %v443
  %v525 = vpop.permute.xlu0 %524
  %v527 = vperm.slane %v438, 4
  %v528 = vmul.f32 %v513, %v527
  %v529 = vmul.f32 %v517, %v527
  %v530 = vmul.f32 %v521, %v527
  %v531 = vmul.f32 %v525, %v527
  %v532 = vadd.f32 %v507, %v528
  %v533 = vadd.f32 %v508, %v529
  %v534 = vadd.f32 %v509, %v530
  %v535 = vadd.f32 %v510, %v531
  %536 = vset.pattern.permute.xlu0 2
  %537 = vperm.xlu0 %536, %v440
  %v538 = vpop.permute.xlu0 %537
  %540 = vset.pattern.permute.xlu0 2
  %541 = vperm.xlu0 %540, %v441
  %v542 = vpop.permute.xlu0 %541
  %544 = vset.pattern.permute.xlu0 2
  %545 = vperm.xlu0 %544, %v442
  %v546 = vpop.permute.xlu0 %545
  %548 = vset.pattern.permute.xlu0 2
  %549 = vperm.xlu0 %548, %v443
  %v550 = vpop.permute.xlu0 %549
  %v552 = vmul.f32 %v538, %v133
  %v553 = vmul.f32 %v542, %v133
  %v554 = vmul.f32 %v546, %v133
  %v555 = vmul.f32 %v550, %v133
  %v556 = vadd.f32 %v532, %v552
  %v557 = vadd.f32 %v533, %v553
  %v558 = vadd.f32 %v534, %v554
  %v559 = vadd.f32 %v535, %v555
  %v560 = vmax.f32 %v556, 0.0
  %v561 = vmax.f32 %v557, 0.0
  %v562 = vmax.f32 %v558, 0.0
  %v563 = vmax.f32 %v559, 0.0
  %565 = vset.pattern.permute.xlu0 0
  %566 = vperm.xlu0 %565, %v457
  %v567 = vpop.permute.xlu0 %566
  %570 = vset.pattern.permute.xlu0 0
  %571 = vperm.xlu0 %570, %v458
  %v572 = vpop.permute.xlu0 %571
  %575 = vset.pattern.permute.xlu0 0
  %576 = vperm.xlu0 %575, %v459
  %v577 = vpop.permute.xlu0 %576
  %580 = vset.pattern.permute.xlu0 0
  %581 = vperm.xlu0 %580, %v460
  %v582 = vpop.permute.xlu0 %581
  %585 = vset.pattern.permute.xlu0 0
  %586 = vperm.xlu0 %585, %v461
  %v587 = vpop.permute.xlu0 %586
  %590 = vset.pattern.permute.xlu0 0
  %591 = vperm.xlu0 %590, %v462
  %v592 = vpop.permute.xlu0 %591
  %v595 = vsel %vm246, %v450, 0
  %v598 = vsel %vm246, %v451, 0
  %v601 = vsel %vm246, %v452, 0
  %v604 = vsel %vm246, %v453, 0
  %v607 = vsel %vm246, %v454, 0
  %v610 = vsel %vm246, %v455, 0
  %612 = vmatpush.msra.mxu0 0.0
  %613 = vmatpush.msra.mxu0 0.0
  %614 = vmatpush.msra.mxu0 0.0
  %615 = vmatpush.msra.mxu0 0.0
  %616 = vmatpush.msra.mxu0 0.0
  %617 = vmatpush.msra.mxu0 0.0
  %618 = vmatpush.msra.mxu0 0.0
  %619 = vmatpush.msra.mxu0 0.0
  %620 = vmatpush.msra.mxu0 0.0
  %621 = vmatpush.msra.mxu0 0.0
  %622 = vmatpush.msra.mxu0 0.0
  %623 = vmatpush.msra.mxu0 0.0
  %624 = vmatpush.msra.mxu0 %v563
  %625 = vmatpush.msra.mxu0 %v562
  %626 = vmatpush.msra.mxu0 %v561
  %627 = vmatpush.msra.mxu0 %v560
  %628 = vmatmul.f32.gmra.mxu0 %v595
  %v629 = vpop.f32.mrf.mxu0
  %v630 = vadd.f32 %v567, %v629
  %631 = vmatmul.f32.gmra.mxu0 %v598
  %v632 = vpop.f32.mrf.mxu0
  %v633 = vadd.f32 %v572, %v632
  %634 = vmatmul.f32.gmra.mxu0 %v601
  %v635 = vpop.f32.mrf.mxu0
  %v636 = vadd.f32 %v577, %v635
  %637 = vmatmul.f32.gmra.mxu0 %v604
  %v638 = vpop.f32.mrf.mxu0
  %v639 = vadd.f32 %v582, %v638
  %640 = vmatmul.f32.gmra.mxu0 %v607
  %v641 = vpop.f32.mrf.mxu0
  %v642 = vadd.f32 %v587, %v641
  %643 = vmatmul.f32.gmra.mxu0 %v610
  %v644 = vpop.f32.mrf.mxu0
  %v645 = vadd.f32 %v592, %v644
  %646 = vdwg.mxu0
  %v647 = vmax.f32 %v630, %v633
  %v648 = vrot.slane %v647, 4
  %v649 = vmax.f32 %v647, %v648
  %v650 = vrot.slane %v649, 2
  %v651 = vmax.f32 %v649, %v650
  %v652 = vrot.slane %v651, 1
  %v653 = vmax.f32 %v651, %v652
  %v654 = vsub.f32 %v630, %v653
  %v655 = vsub.f32 %v633, %v653
  %v656 = vmul.f32 %v654, 1.442695
  %v657 = vpow.pop %v656
  %v658 = vmul.f32 %v655, 1.442695
  %v659 = vpow.pop %v658
  %vm660 = vcmp.ge.f32.partialorder %v348, -1.0
  %vm661 = vcmp.le.f32.partialorder %v348, 1.0
  %vm662 = vmand %vm660, %vm661
  %v663 = vadd.f32 %v348, 1.0
  %v664 = vmul.f32 %v663, 0.5
  %v665 = vmax.f32 %v664, 0.0
  %v666 = vmin.f32 %v665, 1.0
  %v667 = vmul.f32 %v666, 16.0
  %v668 = vperm.slane %v667, 2
  %v669 = vsub.f32 %v668, %v23
  %v670 = vsub.f32 %v668, %v24
  %v671 = vmax.f32 %v669, 0.0
  %v672 = vmax.f32 %v670, 0.0
  %v673 = vmin.f32 %v671, 1.0
  %v674 = vmin.f32 %v672, 1.0
  %v675 = vmul.f32 %v657, %v673
  %v676 = vmul.f32 %v659, %v674
  %v677 = vadd.f32 %v675, %v676
  %v678 = vrot.slane %v677, 4
  %v679 = vadd.f32 %v677, %v678
  %v680 = vrot.slane %v679, 2
  %v681 = vadd.f32 %v679, %v680
  %v682 = vrot.slane %v681, 1
  %v683 = vadd.f32 %v681, %v682
  %v684 = vadd.f32 %v657, %v659
  %v685 = vrot.slane %v684, 4
  %v686 = vadd.f32 %v684, %v685
  %v687 = vrot.slane %v686, 2
  %v688 = vadd.f32 %v686, %v687
  %v689 = vrot.slane %v688, 1
  %v690 = vadd.f32 %v688, %v689
  %v691 = vrcp.pop %v690
  %v692 = vmul.f32 %v683, %v691
  %v693 = vmul.f32 %v692, 2.0
  %v694 = vsub.f32 %v693, 1.0
  %v695 = vsel %vm662, %v694, %v348
  %v696 = vmax.f32 %v636, %v639
  %v697 = vrot.slane %v696, 4
  %v698 = vmax.f32 %v696, %v697
  %v699 = vrot.slane %v698, 2
  %v700 = vmax.f32 %v698, %v699
  %v701 = vrot.slane %v700, 1
  %v702 = vmax.f32 %v700, %v701
  %v703 = vsub.f32 %v636, %v702
  %v704 = vsub.f32 %v639, %v702
  %v705 = vmul.f32 %v703, 1.442695
  %v706 = vpow.pop %v705
  %v707 = vmul.f32 %v704, 1.442695
  %v708 = vpow.pop %v707
  %v709 = vperm.slane %v320, 1
  %v710 = vsub.f32 %v709, %v23
  %v711 = vsub.f32 %v709, %v24
  %v712 = vmax.f32 %v710, 0.0
  %v713 = vmax.f32 %v711, 0.0
  %v714 = vmin.f32 %v712, 1.0
  %v715 = vmin.f32 %v713, 1.0
  %v716 = vmul.f32 %v706, %v714
  %v717 = vmul.f32 %v708, %v715
  %v718 = vadd.f32 %v716, %v717
  %v719 = vrot.slane %v718, 4
  %v720 = vadd.f32 %v718, %v719
  %v721 = vrot.slane %v720, 2
  %v722 = vadd.f32 %v720, %v721
  %v723 = vrot.slane %v722, 1
  %v724 = vadd.f32 %v722, %v723
  %v725 = vadd.f32 %v706, %v708
  %v726 = vrot.slane %v725, 4
  %v727 = vadd.f32 %v725, %v726
  %v728 = vrot.slane %v727, 2
  %v729 = vadd.f32 %v727, %v728
  %v730 = vrot.slane %v729, 1
  %v731 = vadd.f32 %v729, %v730
  %v732 = vrcp.pop %v731
  %v733 = vmul.f32 %v724, %v732
  %v734 = vmul.f32 %v733, 2.0
  %v735 = vsub.f32 %v734, 1.0
  %v736 = vsel %vm315, %v735, %v27
  %v737 = vmax.f32 %v642, %v645
  %v738 = vrot.slane %v737, 4
  %v739 = vmax.f32 %v737, %v738
  %v740 = vrot.slane %v739, 2
  %v741 = vmax.f32 %v739, %v740
  %v742 = vrot.slane %v741, 1
  %v743 = vmax.f32 %v741, %v742
  %v744 = vsub.f32 %v642, %v743
  %v745 = vsub.f32 %v645, %v743
  %v746 = vmul.f32 %v744, 1.442695
  %v747 = vpow.pop %v746
  %v748 = vmul.f32 %v745, 1.442695
  %v749 = vpow.pop %v748
  %vm750 = vcmp.ge.f32.partialorder %v397, -1.0
  %vm751 = vcmp.le.f32.partialorder %v397, 1.0
  %vm752 = vmand %vm750, %vm751
  %v753 = vadd.f32 %v397, 1.0
  %v754 = vmul.f32 %v753, 0.5
  %v755 = vmax.f32 %v754, 0.0
  %v756 = vmin.f32 %v755, 1.0
  %v757 = vmul.f32 %v756, 16.0
  %v758 = vperm.slane %v757, 3
  %v759 = vsub.f32 %v758, %v23
  %v760 = vsub.f32 %v758, %v24
  %v761 = vmax.f32 %v759, 0.0
  %v762 = vmax.f32 %v760, 0.0
  %v763 = vmin.f32 %v761, 1.0
  %v764 = vmin.f32 %v762, 1.0
  %v765 = vmul.f32 %v747, %v763
  %v766 = vmul.f32 %v749, %v764
  %v767 = vadd.f32 %v765, %v766
  %v768 = vrot.slane %v767, 4
  %v769 = vadd.f32 %v767, %v768
  %v770 = vrot.slane %v769, 2
  %v771 = vadd.f32 %v769, %v770
  %v772 = vrot.slane %v771, 1
  %v773 = vadd.f32 %v771, %v772
  %v774 = vadd.f32 %v747, %v749
  %v775 = vrot.slane %v774, 4
  %v776 = vadd.f32 %v774, %v775
  %v777 = vrot.slane %v776, 2
  %v778 = vadd.f32 %v776, %v777
  %v779 = vrot.slane %v778, 1
  %v780 = vadd.f32 %v778, %v779
  %v781 = vrcp.pop %v780
  %v782 = vmul.f32 %v773, %v781
  %v783 = vmul.f32 %v782, 2.0
  %v784 = vsub.f32 %v783, 1.0
  %v785 = vsel %vm752, %v784, %v397
  %s786 = scalar_lea.vmem %s1, 64
  %v787 = vld [vmem:[%s786] sm:$0xff]
  %v788 = vld [vmem:[%s786 + $0x8] sm:$0xff]
  %v789 = vld [vmem:[%s786 + $0x10] sm:$0xff]
  %v790 = vld [vmem:[%s786 + $0x18] sm:$0xff]
  %s791 = scalar_lea.vmem %s2, 64
  %v792 = vld [vmem:[%s791] sm:$0xff]
  %v793 = vld [vmem:[%s791 + $0x8] sm:$0xff]
  %v794 = vld [vmem:[%s791 + $0x10] sm:$0xff]
  %v795 = vld [vmem:[%s791 + $0x18] sm:$0xff]
  %s796 = scalar_lea.vmem %s3, 96
  %v797 = vld [vmem:[%s796] sm:$0xff]
  %v798 = vld [vmem:[%s796 + $0x8] sm:$0xff]
  %v799 = vld [vmem:[%s796 + $0x10] sm:$0xff]
  %v800 = vld [vmem:[%s796 + $0x18] sm:$0xff]
  %v801 = vld [vmem:[%s796 + $0x20] sm:$0xff]
  %v802 = vld [vmem:[%s796 + $0x28] sm:$0xff]
  %s803 = scalar_lea.vmem %s4, 96
  %v804 = vld [vmem:[%s803] sm:$0xff]
  %v805 = vld [vmem:[%s803 + $0x8] sm:$0xff]
  %v806 = vld [vmem:[%s803 + $0x10] sm:$0xff]
  %v807 = vld [vmem:[%s803 + $0x18] sm:$0xff]
  %v808 = vld [vmem:[%s803 + $0x20] sm:$0xff]
  %v809 = vld [vmem:[%s803 + $0x28] sm:$0xff]
  %811 = vset.pattern.permute.xlu0 0
  %812 = vperm.xlu0 %811, %v787
  %v813 = vpop.permute.xlu0 %812
  %816 = vset.pattern.permute.xlu0 0
  %817 = vperm.xlu0 %816, %v788
  %v818 = vpop.permute.xlu0 %817
  %821 = vset.pattern.permute.xlu0 0
  %822 = vperm.xlu0 %821, %v789
  %v823 = vpop.permute.xlu0 %822
  %826 = vset.pattern.permute.xlu0 0
  %827 = vperm.xlu0 %826, %v790
  %v828 = vpop.permute.xlu0 %827
  %v830 = vmul.f32 %v813, %v133
  %v831 = vmul.f32 %v818, %v133
  %v832 = vmul.f32 %v823, %v133
  %v833 = vmul.f32 %v828, %v133
  %835 = vset.pattern.permute.xlu0 0
  %836 = vperm.xlu0 %835, %v792
  %v837 = vpop.permute.xlu0 %836
  %840 = vset.pattern.permute.xlu0 0
  %841 = vperm.xlu0 %840, %v793
  %v842 = vpop.permute.xlu0 %841
  %845 = vset.pattern.permute.xlu0 0
  %846 = vperm.xlu0 %845, %v794
  %v847 = vpop.permute.xlu0 %846
  %850 = vset.pattern.permute.xlu0 0
  %851 = vperm.xlu0 %850, %v795
  %v852 = vpop.permute.xlu0 %851
  %v854 = vadd.f32 %v837, %v830
  %v855 = vadd.f32 %v842, %v831
  %v856 = vadd.f32 %v847, %v832
  %v857 = vadd.f32 %v852, %v833
  %858 = vset.pattern.permute.xlu0 1
  %859 = vperm.xlu0 %858, %v787
  %v860 = vpop.permute.xlu0 %859
  %862 = vset.pattern.permute.xlu0 1
  %863 = vperm.xlu0 %862, %v788
  %v864 = vpop.permute.xlu0 %863
  %866 = vset.pattern.permute.xlu0 1
  %867 = vperm.xlu0 %866, %v789
  %v868 = vpop.permute.xlu0 %867
  %870 = vset.pattern.permute.xlu0 1
  %871 = vperm.xlu0 %870, %v790
  %v872 = vpop.permute.xlu0 %871
  %v874 = vperm.slane %v736, 1
  %v875 = vmul.f32 %v860, %v874
  %v876 = vmul.f32 %v864, %v874
  %v877 = vmul.f32 %v868, %v874
  %v878 = vmul.f32 %v872, %v874
  %v879 = vadd.f32 %v854, %v875
  %v880 = vadd.f32 %v855, %v876
  %v881 = vadd.f32 %v856, %v877
  %v882 = vadd.f32 %v857, %v878
  %883 = vset.pattern.permute.xlu0 2
  %884 = vperm.xlu0 %883, %v787
  %v885 = vpop.permute.xlu0 %884
  %887 = vset.pattern.permute.xlu0 2
  %888 = vperm.xlu0 %887, %v788
  %v889 = vpop.permute.xlu0 %888
  %891 = vset.pattern.permute.xlu0 2
  %892 = vperm.xlu0 %891, %v789
  %v893 = vpop.permute.xlu0 %892
  %895 = vset.pattern.permute.xlu0 2
  %896 = vperm.xlu0 %895, %v790
  %v897 = vpop.permute.xlu0 %896
  %v899 = vmul.f32 %v885, %v527
  %v900 = vmul.f32 %v889, %v527
  %v901 = vmul.f32 %v893, %v527
  %v902 = vmul.f32 %v897, %v527
  %v903 = vadd.f32 %v879, %v899
  %v904 = vadd.f32 %v880, %v900
  %v905 = vadd.f32 %v881, %v901
  %v906 = vadd.f32 %v882, %v902
  %v907 = vmax.f32 %v903, 0.0
  %v908 = vmax.f32 %v904, 0.0
  %v909 = vmax.f32 %v905, 0.0
  %v910 = vmax.f32 %v906, 0.0
  %912 = vset.pattern.permute.xlu0 0
  %913 = vperm.xlu0 %912, %v804
  %v914 = vpop.permute.xlu0 %913
  %917 = vset.pattern.permute.xlu0 0
  %918 = vperm.xlu0 %917, %v805
  %v919 = vpop.permute.xlu0 %918
  %922 = vset.pattern.permute.xlu0 0
  %923 = vperm.xlu0 %922, %v806
  %v924 = vpop.permute.xlu0 %923
  %927 = vset.pattern.permute.xlu0 0
  %928 = vperm.xlu0 %927, %v807
  %v929 = vpop.permute.xlu0 %928
  %932 = vset.pattern.permute.xlu0 0
  %933 = vperm.xlu0 %932, %v808
  %v934 = vpop.permute.xlu0 %933
  %937 = vset.pattern.permute.xlu0 0
  %938 = vperm.xlu0 %937, %v809
  %v939 = vpop.permute.xlu0 %938
  %v942 = vsel %vm246, %v797, 0
  %v945 = vsel %vm246, %v798, 0
  %v948 = vsel %vm246, %v799, 0
  %v951 = vsel %vm246, %v800, 0
  %v954 = vsel %vm246, %v801, 0
  %v957 = vsel %vm246, %v802, 0
  %959 = vmatpush.msra.mxu0 0.0
  %960 = vmatpush.msra.mxu0 0.0
  %961 = vmatpush.msra.mxu0 0.0
  %962 = vmatpush.msra.mxu0 0.0
  %963 = vmatpush.msra.mxu0 0.0
  %964 = vmatpush.msra.mxu0 0.0
  %965 = vmatpush.msra.mxu0 0.0
  %966 = vmatpush.msra.mxu0 0.0
  %967 = vmatpush.msra.mxu0 0.0
  %968 = vmatpush.msra.mxu0 0.0
  %969 = vmatpush.msra.mxu0 0.0
  %970 = vmatpush.msra.mxu0 0.0
  %971 = vmatpush.msra.mxu0 %v910
  %972 = vmatpush.msra.mxu0 %v909
  %973 = vmatpush.msra.mxu0 %v908
  %974 = vmatpush.msra.mxu0 %v907
  %975 = vmatmul.f32.gmra.mxu0 %v942
  %v976 = vpop.f32.mrf.mxu0
  %v977 = vadd.f32 %v914, %v976
  %978 = vmatmul.f32.gmra.mxu0 %v945
  %v979 = vpop.f32.mrf.mxu0
  %v980 = vadd.f32 %v919, %v979
  %981 = vmatmul.f32.gmra.mxu0 %v948
  %v982 = vpop.f32.mrf.mxu0
  %v983 = vadd.f32 %v924, %v982
  %984 = vmatmul.f32.gmra.mxu0 %v951
  %v985 = vpop.f32.mrf.mxu0
  %v986 = vadd.f32 %v929, %v985
  %987 = vmatmul.f32.gmra.mxu0 %v954
  %v988 = vpop.f32.mrf.mxu0
  %v989 = vadd.f32 %v934, %v988
  %990 = vmatmul.f32.gmra.mxu0 %v957
  %v991 = vpop.f32.mrf.mxu0
  %v992 = vadd.f32 %v939, %v991
  %993 = vdwg.mxu0
  %v994 = vmax.f32 %v977, %v980
  %v995 = vrot.slane %v994, 4
  %v996 = vmax.f32 %v994, %v995
  %v997 = vrot.slane %v996, 2
  %v998 = vmax.f32 %v996, %v997
  %v999 = vrot.slane %v998, 1
  %v1000 = vmax.f32 %v998, %v999
  %v1001 = vsub.f32 %v977, %v1000
  %v1002 = vsub.f32 %v980, %v1000
  %v1003 = vmul.f32 %v1001, 1.442695
  %v1004 = vpow.pop %v1003
  %v1005 = vmul.f32 %v1002, 1.442695
  %v1006 = vpow.pop %v1005
  %vm1007 = vcmp.ge.f32.partialorder %v695, -1.0
  %vm1008 = vcmp.le.f32.partialorder %v695, 1.0
  %vm1009 = vmand %vm1007, %vm1008
  %v1010 = vadd.f32 %v695, 1.0
  %v1011 = vmul.f32 %v1010, 0.5
  %v1012 = vmax.f32 %v1011, 0.0
  %v1013 = vmin.f32 %v1012, 1.0
  %v1014 = vmul.f32 %v1013, 16.0
  %v1015 = vperm.slane %v1014, 2
  %v1016 = vsub.f32 %v1015, %v23
  %v1017 = vsub.f32 %v1015, %v24
  %v1018 = vmax.f32 %v1016, 0.0
  %v1019 = vmax.f32 %v1017, 0.0
  %v1020 = vmin.f32 %v1018, 1.0
  %v1021 = vmin.f32 %v1019, 1.0
  %v1022 = vmul.f32 %v1004, %v1020
  %v1023 = vmul.f32 %v1006, %v1021
  %v1024 = vadd.f32 %v1022, %v1023
  %v1025 = vrot.slane %v1024, 4
  %v1026 = vadd.f32 %v1024, %v1025
  %v1027 = vrot.slane %v1026, 2
  %v1028 = vadd.f32 %v1026, %v1027
  %v1029 = vrot.slane %v1028, 1
  %v1030 = vadd.f32 %v1028, %v1029
  %v1031 = vadd.f32 %v1004, %v1006
  %v1032 = vrot.slane %v1031, 4
  %v1033 = vadd.f32 %v1031, %v1032
  %v1034 = vrot.slane %v1033, 2
  %v1035 = vadd.f32 %v1033, %v1034
  %v1036 = vrot.slane %v1035, 1
  %v1037 = vadd.f32 %v1035, %v1036
  %v1038 = vrcp.pop %v1037
  %v1039 = vmul.f32 %v1030, %v1038
  %v1040 = vmul.f32 %v1039, 2.0
  %v1041 = vsub.f32 %v1040, 1.0
  %v1042 = vsel %vm1009, %v1041, %v695
  %v1043 = vmax.f32 %v983, %v986
  %v1044 = vrot.slane %v1043, 4
  %v1045 = vmax.f32 %v1043, %v1044
  %v1046 = vrot.slane %v1045, 2
  %v1047 = vmax.f32 %v1045, %v1046
  %v1048 = vrot.slane %v1047, 1
  %v1049 = vmax.f32 %v1047, %v1048
  %v1050 = vsub.f32 %v983, %v1049
  %v1051 = vsub.f32 %v986, %v1049
  %v1052 = vmul.f32 %v1050, 1.442695
  %v1053 = vpow.pop %v1052
  %v1054 = vmul.f32 %v1051, 1.442695
  %v1055 = vpow.pop %v1054
  %vm1056 = vcmp.ge.f32.partialorder %v785, -1.0
  %vm1057 = vcmp.le.f32.partialorder %v785, 1.0
  %vm1058 = vmand %vm1056, %vm1057
  %v1059 = vadd.f32 %v785, 1.0
  %v1060 = vmul.f32 %v1059, 0.5
  %v1061 = vmax.f32 %v1060, 0.0
  %v1062 = vmin.f32 %v1061, 1.0
  %v1063 = vmul.f32 %v1062, 16.0
  %v1064 = vperm.slane %v1063, 3
  %v1065 = vsub.f32 %v1064, %v23
  %v1066 = vsub.f32 %v1064, %v24
  %v1067 = vmax.f32 %v1065, 0.0
  %v1068 = vmax.f32 %v1066, 0.0
  %v1069 = vmin.f32 %v1067, 1.0
  %v1070 = vmin.f32 %v1068, 1.0
  %v1071 = vmul.f32 %v1053, %v1069
  %v1072 = vmul.f32 %v1055, %v1070
  %v1073 = vadd.f32 %v1071, %v1072
  %v1074 = vrot.slane %v1073, 4
  %v1075 = vadd.f32 %v1073, %v1074
  %v1076 = vrot.slane %v1075, 2
  %v1077 = vadd.f32 %v1075, %v1076
  %v1078 = vrot.slane %v1077, 1
  %v1079 = vadd.f32 %v1077, %v1078
  %v1080 = vadd.f32 %v1053, %v1055
  %v1081 = vrot.slane %v1080, 4
  %v1082 = vadd.f32 %v1080, %v1081
  %v1083 = vrot.slane %v1082, 2
  %v1084 = vadd.f32 %v1082, %v1083
  %v1085 = vrot.slane %v1084, 1
  %v1086 = vadd.f32 %v1084, %v1085
  %v1087 = vrcp.pop %v1086
  %v1088 = vmul.f32 %v1079, %v1087
  %v1089 = vmul.f32 %v1088, 2.0
  %v1090 = vsub.f32 %v1089, 1.0
  %v1091 = vsel %vm1058, %v1090, %v785
  %v1092 = vmax.f32 %v989, %v992
  %v1093 = vrot.slane %v1092, 4
  %v1094 = vmax.f32 %v1092, %v1093
  %v1095 = vrot.slane %v1094, 2
  %v1096 = vmax.f32 %v1094, %v1095
  %v1097 = vrot.slane %v1096, 1
  %v1098 = vmax.f32 %v1096, %v1097
  %v1099 = vsub.f32 %v989, %v1098
  %v1100 = vsub.f32 %v992, %v1098
  %v1101 = vmul.f32 %v1099, 1.442695
  %v1102 = vpow.pop %v1101
  %v1103 = vmul.f32 %v1100, 1.442695
  %v1104 = vpow.pop %v1103
  %v1105 = vperm.slane %v320, 0
  %v1106 = vsub.f32 %v1105, %v23
  %v1107 = vsub.f32 %v1105, %v24
  %v1108 = vmax.f32 %v1106, 0.0
  %v1109 = vmax.f32 %v1107, 0.0
  %v1110 = vmin.f32 %v1108, 1.0
  %v1111 = vmin.f32 %v1109, 1.0
  %v1112 = vmul.f32 %v1102, %v1110
  %v1113 = vmul.f32 %v1104, %v1111
  %v1114 = vadd.f32 %v1112, %v1113
  %v1115 = vrot.slane %v1114, 4
  %v1116 = vadd.f32 %v1114, %v1115
  %v1117 = vrot.slane %v1116, 2
  %v1118 = vadd.f32 %v1116, %v1117
  %v1119 = vrot.slane %v1118, 1
  %v1120 = vadd.f32 %v1118, %v1119
  %v1121 = vadd.f32 %v1102, %v1104
  %v1122 = vrot.slane %v1121, 4
  %v1123 = vadd.f32 %v1121, %v1122
  %v1124 = vrot.slane %v1123, 2
  %v1125 = vadd.f32 %v1123, %v1124
  %v1126 = vrot.slane %v1125, 1
  %v1127 = vadd.f32 %v1125, %v1126
  %v1128 = vrcp.pop %v1127
  %v1129 = vmul.f32 %v1120, %v1128
  %v1130 = vmul.f32 %v1129, 2.0
  %v1131 = vsub.f32 %v1130, 1.0
  %v1132 = vsel %vm315, %v1131, %v27
  %s1133 = scalar_lea.vmem %s1, 96
  %v1134 = vld [vmem:[%s1133] sm:$0xff]
  %v1135 = vld [vmem:[%s1133 + $0x8] sm:$0xff]
  %v1136 = vld [vmem:[%s1133 + $0x10] sm:$0xff]
  %v1137 = vld [vmem:[%s1133 + $0x18] sm:$0xff]
  %s1138 = scalar_lea.vmem %s2, 96
  %v1139 = vld [vmem:[%s1138] sm:$0xff]
  %v1140 = vld [vmem:[%s1138 + $0x8] sm:$0xff]
  %v1141 = vld [vmem:[%s1138 + $0x10] sm:$0xff]
  %v1142 = vld [vmem:[%s1138 + $0x18] sm:$0xff]
  %s1143 = scalar_lea.vmem %s3, 144
  %v1144 = vld [vmem:[%s1143] sm:$0xff]
  %v1145 = vld [vmem:[%s1143 + $0x8] sm:$0xff]
  %v1146 = vld [vmem:[%s1143 + $0x10] sm:$0xff]
  %v1147 = vld [vmem:[%s1143 + $0x18] sm:$0xff]
  %v1148 = vld [vmem:[%s1143 + $0x20] sm:$0xff]
  %v1149 = vld [vmem:[%s1143 + $0x28] sm:$0xff]
  %s1150 = scalar_lea.vmem %s4, 144
  %v1151 = vld [vmem:[%s1150] sm:$0xff]
  %v1152 = vld [vmem:[%s1150 + $0x8] sm:$0xff]
  %v1153 = vld [vmem:[%s1150 + $0x10] sm:$0xff]
  %v1154 = vld [vmem:[%s1150 + $0x18] sm:$0xff]
  %v1155 = vld [vmem:[%s1150 + $0x20] sm:$0xff]
  %v1156 = vld [vmem:[%s1150 + $0x28] sm:$0xff]
  %1158 = vset.pattern.permute.xlu0 0
  %1159 = vperm.xlu0 %1158, %v1134
  %v1160 = vpop.permute.xlu0 %1159
  %1163 = vset.pattern.permute.xlu0 0
  %1164 = vperm.xlu0 %1163, %v1135
  %v1165 = vpop.permute.xlu0 %1164
  %1168 = vset.pattern.permute.xlu0 0
  %1169 = vperm.xlu0 %1168, %v1136
  %v1170 = vpop.permute.xlu0 %1169
  %1173 = vset.pattern.permute.xlu0 0
  %1174 = vperm.xlu0 %1173, %v1137
  %v1175 = vpop.permute.xlu0 %1174
  %v1177 = vperm.slane %v1132, 0
  %v1178 = vmul.f32 %v1160, %v1177
  %v1179 = vmul.f32 %v1165, %v1177
  %v1180 = vmul.f32 %v1170, %v1177
  %v1181 = vmul.f32 %v1175, %v1177
  %1183 = vset.pattern.permute.xlu0 0
  %1184 = vperm.xlu0 %1183, %v1139
  %v1185 = vpop.permute.xlu0 %1184
  %1188 = vset.pattern.permute.xlu0 0
  %1189 = vperm.xlu0 %1188, %v1140
  %v1190 = vpop.permute.xlu0 %1189
  %1193 = vset.pattern.permute.xlu0 0
  %1194 = vperm.xlu0 %1193, %v1141
  %v1195 = vpop.permute.xlu0 %1194
  %1198 = vset.pattern.permute.xlu0 0
  %1199 = vperm.xlu0 %1198, %v1142
  %v1200 = vpop.permute.xlu0 %1199
  %v1202 = vadd.f32 %v1185, %v1178
  %v1203 = vadd.f32 %v1190, %v1179
  %v1204 = vadd.f32 %v1195, %v1180
  %v1205 = vadd.f32 %v1200, %v1181
  %1206 = vset.pattern.permute.xlu0 1
  %1207 = vperm.xlu0 %1206, %v1134
  %v1208 = vpop.permute.xlu0 %1207
  %1210 = vset.pattern.permute.xlu0 1
  %1211 = vperm.xlu0 %1210, %v1135
  %v1212 = vpop.permute.xlu0 %1211
  %1214 = vset.pattern.permute.xlu0 1
  %1215 = vperm.xlu0 %1214, %v1136
  %v1216 = vpop.permute.xlu0 %1215
  %1218 = vset.pattern.permute.xlu0 1
  %1219 = vperm.xlu0 %1218, %v1137
  %v1220 = vpop.permute.xlu0 %1219
  %v1222 = vmul.f32 %v1208, %v874
  %v1223 = vmul.f32 %v1212, %v874
  %v1224 = vmul.f32 %v1216, %v874
  %v1225 = vmul.f32 %v1220, %v874
  %v1226 = vadd.f32 %v1202, %v1222
  %v1227 = vadd.f32 %v1203, %v1223
  %v1228 = vadd.f32 %v1204, %v1224
  %v1229 = vadd.f32 %v1205, %v1225
  %1230 = vset.pattern.permute.xlu0 2
  %1231 = vperm.xlu0 %1230, %v1134
  %v1232 = vpop.permute.xlu0 %1231
  %1234 = vset.pattern.permute.xlu0 2
  %1235 = vperm.xlu0 %1234, %v1135
  %v1236 = vpop.permute.xlu0 %1235
  %1238 = vset.pattern.permute.xlu0 2
  %1239 = vperm.xlu0 %1238, %v1136
  %v1240 = vpop.permute.xlu0 %1239
  %1242 = vset.pattern.permute.xlu0 2
  %1243 = vperm.xlu0 %1242, %v1137
  %v1244 = vpop.permute.xlu0 %1243
  %v1246 = vperm.slane %v1042, 2
  %v1247 = vmul.f32 %v1232, %v1246
  %v1248 = vmul.f32 %v1236, %v1246
  %v1249 = vmul.f32 %v1240, %v1246
  %v1250 = vmul.f32 %v1244, %v1246
  %v1251 = vadd.f32 %v1226, %v1247
  %v1252 = vadd.f32 %v1227, %v1248
  %v1253 = vadd.f32 %v1228, %v1249
  %v1254 = vadd.f32 %v1229, %v1250
  %v1255 = vmax.f32 %v1251, 0.0
  %v1256 = vmax.f32 %v1252, 0.0
  %v1257 = vmax.f32 %v1253, 0.0
  %v1258 = vmax.f32 %v1254, 0.0
  %1260 = vset.pattern.permute.xlu0 0
  %1261 = vperm.xlu0 %1260, %v1151
  %v1262 = vpop.permute.xlu0 %1261
  %1265 = vset.pattern.permute.xlu0 0
  %1266 = vperm.xlu0 %1265, %v1152
  %v1267 = vpop.permute.xlu0 %1266
  %1270 = vset.pattern.permute.xlu0 0
  %1271 = vperm.xlu0 %1270, %v1153
  %v1272 = vpop.permute.xlu0 %1271
  %1275 = vset.pattern.permute.xlu0 0
  %1276 = vperm.xlu0 %1275, %v1154
  %v1277 = vpop.permute.xlu0 %1276
  %1280 = vset.pattern.permute.xlu0 0
  %1281 = vperm.xlu0 %1280, %v1155
  %v1282 = vpop.permute.xlu0 %1281
  %1285 = vset.pattern.permute.xlu0 0
  %1286 = vperm.xlu0 %1285, %v1156
  %v1287 = vpop.permute.xlu0 %1286
  %v1290 = vsel %vm246, %v1144, 0
  %v1293 = vsel %vm246, %v1145, 0
  %v1296 = vsel %vm246, %v1146, 0
  %v1299 = vsel %vm246, %v1147, 0
  %v1302 = vsel %vm246, %v1148, 0
  %v1305 = vsel %vm246, %v1149, 0
  %1307 = vmatpush.msra.mxu0 0.0
  %1308 = vmatpush.msra.mxu0 0.0
  %1309 = vmatpush.msra.mxu0 0.0
  %1310 = vmatpush.msra.mxu0 0.0
  %1311 = vmatpush.msra.mxu0 0.0
  %1312 = vmatpush.msra.mxu0 0.0
  %1313 = vmatpush.msra.mxu0 0.0
  %1314 = vmatpush.msra.mxu0 0.0
  %1315 = vmatpush.msra.mxu0 0.0
  %1316 = vmatpush.msra.mxu0 0.0
  %1317 = vmatpush.msra.mxu0 0.0
  %1318 = vmatpush.msra.mxu0 0.0
  %1319 = vmatpush.msra.mxu0 %v1258
  %1320 = vmatpush.msra.mxu0 %v1257
  %1321 = vmatpush.msra.mxu0 %v1256
  %1322 = vmatpush.msra.mxu0 %v1255
  %1323 = vmatmul.f32.gmra.mxu0 %v1290
  %v1324 = vpop.f32.mrf.mxu0
  %v1325 = vadd.f32 %v1262, %v1324
  %1326 = vmatmul.f32.gmra.mxu0 %v1293
  %v1327 = vpop.f32.mrf.mxu0
  %v1328 = vadd.f32 %v1267, %v1327
  %1329 = vmatmul.f32.gmra.mxu0 %v1296
  %v1330 = vpop.f32.mrf.mxu0
  %v1331 = vadd.f32 %v1272, %v1330
  %1332 = vmatmul.f32.gmra.mxu0 %v1299
  %v1333 = vpop.f32.mrf.mxu0
  %v1334 = vadd.f32 %v1277, %v1333
  %1335 = vmatmul.f32.gmra.mxu0 %v1302
  %v1336 = vpop.f32.mrf.mxu0
  %v1337 = vadd.f32 %v1282, %v1336
  %1338 = vmatmul.f32.gmra.mxu0 %v1305
  %v1339 = vpop.f32.mrf.mxu0
  %v1340 = vadd.f32 %v1287, %v1339
  %1341 = vdwg.mxu0
  %v1342 = vmax.f32 %v1325, %v1328
  %v1343 = vrot.slane %v1342, 4
  %v1344 = vmax.f32 %v1342, %v1343
  %v1345 = vrot.slane %v1344, 2
  %v1346 = vmax.f32 %v1344, %v1345
  %v1347 = vrot.slane %v1346, 1
  %v1348 = vmax.f32 %v1346, %v1347
  %v1349 = vsub.f32 %v1325, %v1348
  %v1350 = vsub.f32 %v1328, %v1348
  %v1351 = vmul.f32 %v1349, 1.442695
  %v1352 = vpow.pop %v1351
  %v1353 = vmul.f32 %v1350, 1.442695
  %v1354 = vpow.pop %v1353
  %v1355 = vperm.slane %v369, 5
  %v1356 = vsub.f32 %v1355, %v23
  %v1357 = vsub.f32 %v1355, %v24
  %v1358 = vmax.f32 %v1356, 0.0
  %v1359 = vmax.f32 %v1357, 0.0
  %v1360 = vmin.f32 %v1358, 1.0
  %v1361 = vmin.f32 %v1359, 1.0
  %v1362 = vmul.f32 %v1352, %v1360
  %v1363 = vmul.f32 %v1354, %v1361
  %v1364 = vadd.f32 %v1362, %v1363
  %v1365 = vrot.slane %v1364, 4
  %v1366 = vadd.f32 %v1364, %v1365
  %v1367 = vrot.slane %v1366, 2
  %v1368 = vadd.f32 %v1366, %v1367
  %v1369 = vrot.slane %v1368, 1
  %v1370 = vadd.f32 %v1368, %v1369
  %v1371 = vadd.f32 %v1352, %v1354
  %v1372 = vrot.slane %v1371, 4
  %v1373 = vadd.f32 %v1371, %v1372
  %v1374 = vrot.slane %v1373, 2
  %v1375 = vadd.f32 %v1373, %v1374
  %v1376 = vrot.slane %v1375, 1
  %v1377 = vadd.f32 %v1375, %v1376
  %v1378 = vrcp.pop %v1377
  %v1379 = vmul.f32 %v1370, %v1378
  %v1380 = vmul.f32 %v1379, 2.0
  %v1381 = vsub.f32 %v1380, 1.0
  %v1382 = vsel %vm364, %v1381, %v92
  %v1383 = vmax.f32 %v1331, %v1334
  %v1384 = vrot.slane %v1383, 4
  %v1385 = vmax.f32 %v1383, %v1384
  %v1386 = vrot.slane %v1385, 2
  %v1387 = vmax.f32 %v1385, %v1386
  %v1388 = vrot.slane %v1387, 1
  %v1389 = vmax.f32 %v1387, %v1388
  %v1390 = vsub.f32 %v1331, %v1389
  %v1391 = vsub.f32 %v1334, %v1389
  %v1392 = vmul.f32 %v1390, 1.442695
  %v1393 = vpow.pop %v1392
  %v1394 = vmul.f32 %v1391, 1.442695
  %v1395 = vpow.pop %v1394
  %vm1396 = vcmp.ge.f32.partialorder %v438, -1.0
  %vm1397 = vcmp.le.f32.partialorder %v438, 1.0
  %vm1398 = vmand %vm1396, %vm1397
  %v1399 = vadd.f32 %v438, 1.0
  %v1400 = vmul.f32 %v1399, 0.5
  %v1401 = vmax.f32 %v1400, 0.0
  %v1402 = vmin.f32 %v1401, 1.0
  %v1403 = vmul.f32 %v1402, 16.0
  %v1404 = vperm.slane %v1403, 4
  %v1405 = vsub.f32 %v1404, %v23
  %v1406 = vsub.f32 %v1404, %v24
  %v1407 = vmax.f32 %v1405, 0.0
  %v1408 = vmax.f32 %v1406, 0.0
  %v1409 = vmin.f32 %v1407, 1.0
  %v1410 = vmin.f32 %v1408, 1.0
  %v1411 = vmul.f32 %v1393, %v1409
  %v1412 = vmul.f32 %v1395, %v1410
  %v1413 = vadd.f32 %v1411, %v1412
  %v1414 = vrot.slane %v1413, 4
  %v1415 = vadd.f32 %v1413, %v1414
  %v1416 = vrot.slane %v1415, 2
  %v1417 = vadd.f32 %v1415, %v1416
  %v1418 = vrot.slane %v1417, 1
  %v1419 = vadd.f32 %v1417, %v1418
  %v1420 = vadd.f32 %v1393, %v1395
  %v1421 = vrot.slane %v1420, 4
  %v1422 = vadd.f32 %v1420, %v1421
  %v1423 = vrot.slane %v1422, 2
  %v1424 = vadd.f32 %v1422, %v1423
  %v1425 = vrot.slane %v1424, 1
  %v1426 = vadd.f32 %v1424, %v1425
  %v1427 = vrcp.pop %v1426
  %v1428 = vmul.f32 %v1419, %v1427
  %v1429 = vmul.f32 %v1428, 2.0
  %v1430 = vsub.f32 %v1429, 1.0
  %v1431 = vsel %vm1398, %v1430, %v438
  %v1432 = vmax.f32 %v1337, %v1340
  %v1433 = vrot.slane %v1432, 4
  %v1434 = vmax.f32 %v1432, %v1433
  %v1435 = vrot.slane %v1434, 2
  %v1436 = vmax.f32 %v1434, %v1435
  %v1437 = vrot.slane %v1436, 1
  %v1438 = vmax.f32 %v1436, %v1437
  %v1439 = vsub.f32 %v1337, %v1438
  %v1440 = vsub.f32 %v1340, %v1438
  %v1441 = vmul.f32 %v1439, 1.442695
  %v1442 = vpow.pop %v1441
  %v1443 = vmul.f32 %v1440, 1.442695
  %v1444 = vpow.pop %v1443
  %vm1445 = vcmp.ge.f32.partialorder %v1091, -1.0
  %vm1446 = vcmp.le.f32.partialorder %v1091, 1.0
  %vm1447 = vmand %vm1445, %vm1446
  %v1448 = vadd.f32 %v1091, 1.0
  %v1449 = vmul.f32 %v1448, 0.5
  %v1450 = vmax.f32 %v1449, 0.0
  %v1451 = vmin.f32 %v1450, 1.0
  %v1452 = vmul.f32 %v1451, 16.0
  %v1453 = vperm.slane %v1452, 3
  %v1454 = vsub.f32 %v1453, %v23
  %v1455 = vsub.f32 %v1453, %v24
  %v1456 = vmax.f32 %v1454, 0.0
  %v1457 = vmax.f32 %v1455, 0.0
  %v1458 = vmin.f32 %v1456, 1.0
  %v1459 = vmin.f32 %v1457, 1.0
  %v1460 = vmul.f32 %v1442, %v1458
  %v1461 = vmul.f32 %v1444, %v1459
  %v1462 = vadd.f32 %v1460, %v1461
  %v1463 = vrot.slane %v1462, 4
  %v1464 = vadd.f32 %v1462, %v1463
  %v1465 = vrot.slane %v1464, 2
  %v1466 = vadd.f32 %v1464, %v1465
  %v1467 = vrot.slane %v1466, 1
  %v1468 = vadd.f32 %v1466, %v1467
  %v1469 = vadd.f32 %v1442, %v1444
  %v1470 = vrot.slane %v1469, 4
  %v1471 = vadd.f32 %v1469, %v1470
  %v1472 = vrot.slane %v1471, 2
  %v1473 = vadd.f32 %v1471, %v1472
  %v1474 = vrot.slane %v1473, 1
  %v1475 = vadd.f32 %v1473, %v1474
  %v1476 = vrcp.pop %v1475
  %v1477 = vmul.f32 %v1468, %v1476
  %v1478 = vmul.f32 %v1477, 2.0
  %v1479 = vsub.f32 %v1478, 1.0
  %v1480 = vsel %vm1447, %v1479, %v1091
  %v1482 = vrot.slane %v1382, 5
  %v1485 = vrot.slane %v1431, 3
  %v1488 = vrot.slane %v1480, 1
  %v1491 = vrot.slane %v1132, 5
  %v1494 = vrot.slane %v736, 5
  %v1497 = vrot.slane %v1042, 5
  %vm1499 = vcmask 1040384
  %v1500 = vsel %vm1499, %v1482, %v1485
  %vm1501 = vcmask 1041408
  %v1502 = vsel %vm1501, %v1500, %v1488
  %vm1503 = vcmask 1042432
  %v1504 = vsel %vm1503, %v1502, %v1491
  %vm1505 = vcmask 1043456
  %v1506 = vsel %vm1505, %v1504, %v1494
  %vm1507 = vcmask 1044480
  %v1508 = vsel %vm1507, %v1506, %v1497
  %1509 = vst [vmem:[%s5] sm:$0x3f] %v1508
  // Predicated region
  $region22: #{forward.1} parent=0 // pred_check
    _
  $region23: #{forward.1} parent=0 // pred_check_branch
    %1511 = sbr.rel (0) target = $region25
  $region24: #{forward.1} parent=0 // pred_region
    _
  $region25: #{forward.1} parent=0 // pred_fallthru
    _
  // Predicated region
  $region26: #{forward.1} parent=0 // pred_check
    _
  $region27: #{forward.1} parent=0 // pred_check_branch
    %1513 = sbr.rel (0) target = $region29
  $region28: #{forward.1} parent=0 // pred_region
    _
  $region29: #{forward.1} parent=0 // pred_fallthru
    _

</llo_original>
